<compile_context>
chip_gen: v7x
topology: tpu7x:2x2x1
jax: 0.10.0
libtpu: 0.0.40
codegen_flags: <defaults>
</compile_context>

<pallas_src>
import numpy as np
import jax
import jax.numpy as jnp
from jax.experimental import pallas as pl
from jax.experimental.pallas import tpu as pltpu


# --------------------------- fused Pallas kernel ------------------------------

def _make_fused_kernel(BC, K, D, offs):
    half = D // 2
    neg_log_ts_over_half = -float(np.log(10000.0)) / float(half)
    half_pi = float(np.pi / 2.0)
    hi = jax.lax.Precision.HIGHEST

    def kernel(ctx_ref, t_ref, x_ref, p_ref, o_ref):
        # ---- packed parameter buffer: one VMEM operand, static row slices
        # (all section offsets are 8-row aligned -> plain vector loads).
        w_fused  = p_ref[pl.ds(offs["w_fused"], K), :]        # (K,  PW)
        film_w   = p_ref[pl.ds(offs["film_w"], D), :]         # (D,  PW)
        b_fused  = p_ref[pl.ds(offs["b_fused"], 1), :]        # (1,  PW)
        conv_b   = p_ref[pl.ds(offs["conv_b"], 1), :]         # (1,  PW)
        mask_scl = p_ref[pl.ds(offs["mask_scale"], BC), :]    # (BC, PW)
        mask_shf = p_ref[pl.ds(offs["mask_shift"], BC), :]    # (BC, PW)
        wbd      = p_ref[pl.ds(offs["wbd"], BC), :][:, :BC]   # (BC, BC)

        # ---- sinusoidal time embedding (EUP exp/sin); rows are pre-expanded
        # to B*C in the wrapper.  concat([sin(a), cos(a)]) == sin([a, a+pi/2])
        # -> no in-kernel concatenate.
        d_idx = jax.lax.broadcasted_iota(jnp.int32, (1, D), 1)
        is_cos = (d_idx >= half).astype(jnp.float32)               # (1, D)
        k_idx = d_idx.astype(jnp.float32) - float(half) * is_cos   # d mod half
        freqs = jnp.exp(k_idx * neg_log_ts_over_half)              # (1, D)
        t_emb = jnp.sin(t_ref[...] * freqs + is_cos * half_pi)     # (BC, D)

        # ---- context_embedder + FiLM dense, algebraically fused:
        #   film = ctx @ (emb_w @ film_w) + t_emb @ film_w + (emb_b @ film_w + film_b)
        # Two INDEPENDENT tiny MXU dots (no serialized MRF push->pop->push).
        film = (jnp.dot(ctx_ref[...], w_fused,
                        preferred_element_type=jnp.float32, precision=hi)
                + jnp.dot(t_emb, film_w,
                          preferred_element_type=jnp.float32, precision=hi)
                + b_fused)                                          # (BC, PW)

        # ---- FiLM gain/bias and conv bias as (B*C, 1) columns via masked
        # lane reductions (hoisted once; no per-channel (1,1) broadcasts).
        gain  = 1.0 + jnp.sum(film * mask_scl, axis=1, keepdims=True)   # (BC, 1)
        shift = jnp.sum(film * mask_shf, axis=1, keepdims=True)         # (BC, 1)
        cbias = jnp.sum(conv_b * mask_scl, axis=1, keepdims=True)       # (BC, 1)

        # ---- 1x1 conv on the whole (B*C, HW) block as one block-diagonal
        # matmul; FiLM applied with two broadcast FMAs; single lane-dense store.
        h = jnp.dot(wbd, x_ref[...],
                    preferred_element_type=jnp.float32, precision=hi) + cbias
        o_ref[...] = h * gain + shift

    return kernel


@jax.jit
def _fused_forward(x_t, t, context_parts, params):
    B, C, H, W = x_t.shape
    HW = H * W
    BC = B * C
    K, D = params["emb_w"].shape
    C2 = 2 * C
    PW = max(C2, BC)                      # common lane width of the packed buffer
    hi = jax.lax.Precision.HIGHEST

    # ---- adapter: concat(context, dim=1) done in the wrapper (XLA-folded);
    # the unsqueeze(dim=1) is a pure view consumed by the embedder.
    ctx = jnp.concatenate(context_parts, axis=1).astype(jnp.float32)     # (B, K)
    ctx_exp = jnp.repeat(ctx, C, axis=0)                                 # (BC, K)
    t_col = jnp.repeat(t.astype(jnp.float32), C).reshape(BC, 1)          # (BC, 1)
    x_flat = x_t.reshape(BC, HW)                                         # NCHW view

    # ---- host-side parameter prep (tiny, outside the kernel).
    # Fuse the two dependent dense layers: emb -> FiLM.
    w_fused = jnp.dot(params["emb_w"], params["film_w"], precision=hi)   # (K, 2C)
    b_fused = (jnp.dot(params["emb_b"][None, :], params["film_w"], precision=hi)
               + params["film_b"][None, :])                              # (1, 2C)
    # Block-diagonal 1x1-conv weight over the (B*C, HW) row layout:
    #   wbd[b*C+co, b*C+ci] = conv_w[ci, co]
    wbd = jnp.kron(jnp.eye(B, dtype=jnp.float32), params["conv_w"].T)    # (BC, BC)

    # FiLM / conv-bias lane-selection masks (compile-time constants):
    #   mask_scale[r, j] = (j == r % C), mask_shift[r, j] = (j == C + r % C)
    c_of_row = np.arange(BC) % C
    mask_scale = (np.arange(PW)[None, :] == c_of_row[:, None]).astype(np.float32)
    mask_shift = (np.arange(PW)[None, :] == (c_of_row + C)[:, None]).astype(np.float32)

    def _pad(a):  # pad each section to 8-row alignment and PW lanes
        rows8 = ((a.shape[0] + 7) // 8) * 8
        return jnp.pad(a, ((0, rows8 - a.shape[0]), (0, PW - a.shape[1])))

    sections = {
        "w_fused": w_fused,
        "film_w": params["film_w"],
        "b_fused": b_fused,
        "conv_b": params["conv_b"][None, :],
        "mask_scale": jnp.asarray(mask_scale),
        "mask_shift": jnp.asarray(mask_shift),
        "wbd": wbd,
    }
    offs, blocks, row = {}, [], 0
    for name, arr in sections.items():
        blk = _pad(arr)
        offs[name] = row
        row += blk.shape[0]
        blocks.append(blk)
    param_buf = jnp.concatenate(blocks, axis=0)                          # (rows, PW)

    kernel = _make_fused_kernel(BC, K, D, offs)
    vmem = pl.BlockSpec(memory_space=pltpu.MemorySpace.VMEM)

    out_flat = pl.pallas_call(
        kernel,
        out_shape=jax.ShapeDtypeStruct((BC, HW), jnp.float32),
        in_specs=[vmem, vmem, vmem, vmem],
        out_specs=vmem,
    )(ctx_exp, t_col, x_flat, param_buf)

    return out_flat.reshape(B, C, H, W)


def context_adapter_p_theta_forward(x_t, t, params, context_keys,
                                    p_theta_model_call_context_key="context",
                                    **kwargs):
    """Mirrors ContextAdapterPThetaModel.forward; adapter + context_embedder +
    wrapped p_theta model are fused into a single Pallas kernel."""
    kwargs = dict(kwargs)
    context_parts = tuple(kwargs.pop(k) for k in context_keys)
    assert p_theta_model_call_context_key not in kwargs, (
        f"{p_theta_model_call_context_key} already exists in kwargs of model call")
    # TODO(synk): original_p_theta_model / context_embedder are arbitrary
    # nn.Modules in PyTorch; the synthetic Linear embedder + FiLM 1x1-conv
    # denoiser stand in for them (same data flow), fused into one kernel.
    return _fused_forward(x_t, t, context_parts, params)


# --------------------------- pure-jnp reference --------------------------------

def sinusoidal_time_embedding(t, dim):
    half = dim // 2
    freqs = jnp.exp(-jnp.log(10000.0) * jnp.arange(half, dtype=jnp.float32) / half)
    ang = t.astype(jnp.float32)[:, None] * freqs[None, :]
    return jnp.concatenate([jnp.sin(ang), jnp.cos(ang)], axis=-1)   # (B, dim)


def reference_forward(x_t, t, params, context_keys, **kwargs):
    kwargs = dict(kwargs)
    parts = [kwargs.pop(k) for k in context_keys]
    context = jnp.concatenate(parts, axis=1)[:, None, :]            # concat dim=1, unsqueeze
    B, _, K = context.shape
    emb = context.reshape(B, K) @ params["emb_w"] + params["emb_b"]
    context = emb[:, None, :]                                       # context_embedder output

    Bx, C, H, W = x_t.shape
    D = context.shape[-1]
    t_emb = sinusoidal_time_embedding(t, D)
    cond = context[:, 0, :] + t_emb
    film = cond @ params["film_w"] + params["film_b"]
    scale, shift = film[:, :C], film[:, C:]

    x_flat = x_t.reshape(Bx, C, H * W)                              # NCHW view
    h = (x_flat[:, :, None, :] * params["conv_w"][None, :, :, None]).sum(axis=1)
    h = h + params["conv_b"][None, :, None]                         # (B, Cout, HW)
    out = h * (1.0 + scale[:, :, None]) + shift[:, :, None]
    return out.reshape(Bx, C, H, W)


# --------------------------- main ---------------------------------------------

if __name__ == "__main__":
    B, C, H, W = 2, 4, 16, 16
    K_CTX_A, K_CTX_B = 8, 8
    K_CTX = K_CTX_A + K_CTX_B
    D = 32

    key = jax.random.PRNGKey(0)
    kx, kt, ka, kb, k1, k2, k3, k4, k5, k6 = jax.random.split(key, 10)

    x_t = jax.random.normal(kx, (B, C, H, W), dtype=jnp.float32)
    t = jnp.array([3.0, 7.0], dtype=jnp.float32)
    ctx_a = jax.random.normal(ka, (B, K_CTX_A), dtype=jnp.float32)
    ctx_b = jax.random.normal(kb, (B, K_CTX_B), dtype=jnp.float32)

    params = {
        # context_embedder: Linear(K_CTX -> D)
        "emb_w": 0.05 * jax.random.normal(k1, (K_CTX, D), dtype=jnp.float32),
        "emb_b": 0.01 * jax.random.normal(k2, (D,), dtype=jnp.float32),
        # FiLM projection: Linear(D -> 2C)
        "film_w": 0.05 * jax.random.normal(k3, (D, 2 * C), dtype=jnp.float32),
        "film_b": 0.01 * jax.random.normal(k4, (2 * C,), dtype=jnp.float32),
        # 1x1 conv: (Cin, Cout) + bias
        "conv_w": 0.1 * jax.random.normal(k5, (C, C), dtype=jnp.float32),
        "conv_b": 0.01 * jax.random.normal(k6, (C,), dtype=jnp.float32),
    }

    context_keys = ["ctx_a", "ctx_b"]

    out = context_adapter_p_theta_forward(
        x_t, t, params, context_keys, ctx_a=ctx_a, ctx_b=ctx_b
    )
    out = jax.block_until_ready(out)

    # Reference in full-f32 matmul precision; kernel dots use Precision.HIGHEST,
    # so the remaining delta is only the (tiny) algebraic re-association of the
    # fused dense layers.
    with jax.default_matmul_precision("float32"):
        ref = reference_forward(x_t, t, params, context_keys, ctx_a=ctx_a, ctx_b=ctx_b)

    np.testing.assert_allclose(np.asarray(out), np.asarray(ref),
                               rtol=1e-3, atol=1e-3)
    assert out.shape == (B, C, H, W)

    print("KERNEL_OK")
</pallas_src>

<mosaic_0001>
module attributes {stable_mosaic.version = 11 : i64} {
  func.func @kernel(%arg0: memref<8x16xf32, #tpu.memory_space<vmem>>, %arg1: memref<8x1xf32, #tpu.memory_space<vmem>>, %arg2: memref<8x256xf32, #tpu.memory_space<vmem>>, %arg3: memref<88x8xf32, #tpu.memory_space<vmem>>, %arg4: memref<8x256xf32, #tpu.memory_space<vmem>>) attributes {dimension_semantics = [], scalar_prefetch = 0 : i64, scratch_operands = 0 : i64, tpu.core_type = #tpu.core_type<tc>} {
    %c0 = arith.constant 0 : index
    %c0_0 = arith.constant 0 : index
    %0 = vector.load %arg3[%c0, %c0_0] : memref<88x8xf32, #tpu.memory_space<vmem>>, vector<16x8xf32>
    %c16 = arith.constant 16 : index
    %c0_1 = arith.constant 0 : index
    %1 = vector.load %arg3[%c16, %c0_1] : memref<88x8xf32, #tpu.memory_space<vmem>>, vector<32x8xf32>
    %c48 = arith.constant 48 : index
    %c0_2 = arith.constant 0 : index
    %2 = vector.load %arg3[%c48, %c0_2] : memref<88x8xf32, #tpu.memory_space<vmem>>, vector<1x8xf32>
    %c56 = arith.constant 56 : index
    %c0_3 = arith.constant 0 : index
    %3 = vector.load %arg3[%c56, %c0_3] : memref<88x8xf32, #tpu.memory_space<vmem>>, vector<1x8xf32>
    %c64 = arith.constant 64 : index
    %c0_4 = arith.constant 0 : index
    %4 = vector.load %arg3[%c64, %c0_4] : memref<88x8xf32, #tpu.memory_space<vmem>>, vector<8x8xf32>
    %c72 = arith.constant 72 : index
    %c0_5 = arith.constant 0 : index
    %5 = vector.load %arg3[%c72, %c0_5] : memref<88x8xf32, #tpu.memory_space<vmem>>, vector<8x8xf32>
    %c80 = arith.constant 80 : index
    %c0_6 = arith.constant 0 : index
    %6 = vector.load %arg3[%c80, %c0_6] : memref<88x8xf32, #tpu.memory_space<vmem>>, vector<8x8xf32>
    %7 = tpu.iota {dimensions = array<i32: 1>} : vector<1x32xi32>
    %c16_i32 = arith.constant 16 : i32
    %8 = vector.broadcast %c16_i32 : i32 to vector<1x32xi32>
    %9 = arith.cmpi sge, %7, %8 : vector<1x32xi32>
    %10 = arith.extui %9 : vector<1x32xi1> to vector<1x32xi32>
    %11 = arith.sitofp %10 : vector<1x32xi32> to vector<1x32xf32>
    %12 = arith.sitofp %7 : vector<1x32xi32> to vector<1x32xf32>
    %cst = arith.constant 1.600000e+01 : f32
    %13 = vector.broadcast %cst : f32 to vector<1x32xf32>
    %14 = arith.mulf %13, %11 : vector<1x32xf32>
    %15 = arith.subf %12, %14 : vector<1x32xf32>
    %cst_7 = arith.constant -0.575646281 : f32
    %16 = vector.broadcast %cst_7 : f32 to vector<1x32xf32>
    %17 = arith.mulf %15, %16 : vector<1x32xf32>
    %18 = math.exp %17 : vector<1x32xf32>
    %c0_8 = arith.constant 0 : index
    %c0_9 = arith.constant 0 : index
    %19 = vector.load %arg1[%c0_8, %c0_9] : memref<8x1xf32, #tpu.memory_space<vmem>>, vector<8x1xf32>
    %20 = vector.broadcast %19 : vector<8x1xf32> to vector<8x32xf32>
    %21 = vector.broadcast %18 : vector<1x32xf32> to vector<8x32xf32>
    %22 = arith.mulf %20, %21 : vector<8x32xf32>
    %cst_10 = arith.constant 1.57079637 : f32
    %23 = vector.broadcast %cst_10 : f32 to vector<1x32xf32>
    %24 = arith.mulf %11, %23 : vector<1x32xf32>
    %25 = vector.broadcast %24 : vector<1x32xf32> to vector<8x32xf32>
    %26 = arith.addf %22, %25 : vector<8x32xf32>
    %27 = math.sin %26 : vector<8x32xf32>
    %c0_11 = arith.constant 0 : index
    %c0_12 = arith.constant 0 : index
    %28 = vector.load %arg0[%c0_11, %c0_12] : memref<8x16xf32, #tpu.memory_space<vmem>>, vector<8x16xf32>
    %cst_13 = arith.constant dense<0.000000e+00> : vector<8x8xf32>
    %29 = tpu.matmul %28, %0, %cst_13 {dimension_numbers = #tpu.dot_dimension_numbers<[1], [0], [0], [1], [0, 0, 1, 1], [], []>, precision = #tpu.contract_precision<fp32>} : vector<8x16xf32>, vector<16x8xf32>, vector<8x8xf32> -> vector<8x8xf32>
    %cst_14 = arith.constant dense<0.000000e+00> : vector<8x8xf32>
    %30 = tpu.matmul %27, %1, %cst_14 {dimension_numbers = #tpu.dot_dimension_numbers<[1], [0], [0], [1], [0, 0, 1, 1], [], []>, precision = #tpu.contract_precision<fp32>} : vector<8x32xf32>, vector<32x8xf32>, vector<8x8xf32> -> vector<8x8xf32>
    %31 = arith.addf %29, %30 : vector<8x8xf32>
    %32 = vector.broadcast %2 : vector<1x8xf32> to vector<8x8xf32>
    %33 = arith.addf %31, %32 : vector<8x8xf32>
    %34 = arith.mulf %33, %4 : vector<8x8xf32>
    %cst_15 = arith.constant dense<0.000000e+00> : vector<8xf32>
    %35 = vector.multi_reduction <add>, %34, %cst_15 [1] : vector<8x8xf32> to vector<8xf32>
    %36 = vector.shape_cast %35 : vector<8xf32> to vector<8x1xf32>
    %cst_16 = arith.constant 1.000000e+00 : f32
    %37 = vector.broadcast %cst_16 : f32 to vector<8x1xf32>
    %38 = arith.addf %37, %36 : vector<8x1xf32>
    %39 = arith.mulf %33, %5 : vector<8x8xf32>
    %cst_17 = arith.constant dense<0.000000e+00> : vector<8xf32>
    %40 = vector.multi_reduction <add>, %39, %cst_17 [1] : vector<8x8xf32> to vector<8xf32>
    %41 = vector.shape_cast %40 : vector<8xf32> to vector<8x1xf32>
    %42 = vector.broadcast %3 : vector<1x8xf32> to vector<8x8xf32>
    %43 = arith.mulf %42, %4 : vector<8x8xf32>
    %cst_18 = arith.constant dense<0.000000e+00> : vector<8xf32>
    %44 = vector.multi_reduction <add>, %43, %cst_18 [1] : vector<8x8xf32> to vector<8xf32>
    %45 = vector.shape_cast %44 : vector<8xf32> to vector<8x1xf32>
    %c0_19 = arith.constant 0 : index
    %c0_20 = arith.constant 0 : index
    %46 = vector.load %arg2[%c0_19, %c0_20] : memref<8x256xf32, #tpu.memory_space<vmem>>, vector<8x256xf32>
    %cst_21 = arith.constant dense<0.000000e+00> : vector<8x256xf32>
    %47 = tpu.matmul %6, %46, %cst_21 {dimension_numbers = #tpu.dot_dimension_numbers<[1], [0], [0], [1], [0, 0, 1, 1], [], []>, precision = #tpu.contract_precision<fp32>} : vector<8x8xf32>, vector<8x256xf32>, vector<8x256xf32> -> vector<8x256xf32>
    %48 = vector.broadcast %45 : vector<8x1xf32> to vector<8x256xf32>
    %49 = arith.addf %47, %48 : vector<8x256xf32>
    %50 = vector.broadcast %38 : vector<8x1xf32> to vector<8x256xf32>
    %51 = arith.mulf %49, %50 : vector<8x256xf32>
    %52 = vector.broadcast %41 : vector<8x1xf32> to vector<8x256xf32>
    %53 = arith.addf %51, %52 : vector<8x256xf32>
    %c0_22 = arith.constant 0 : index
    %c0_23 = arith.constant 0 : index
    %54 = vector.load %arg4[%c0_22, %c0_23] : memref<8x256xf32, #tpu.memory_space<vmem>>, vector<8x256xf32>
    tpu.vector_store %arg4[%c0_22, %c0_23], %53 {strides = array<i32>} : memref<8x256xf32, #tpu.memory_space<vmem>>, vector<8x256xf32>,
    return
  }
}

</mosaic_0001>

<llo_original>
// kernel: _fused_forward.1
$region0: #{_fused_forward.1}
  #allocation0 [shape = 'u32[]', space=smem, size = 0x4, offset = 0x4, fixed_abs, tag = 'smem constant byte address 0x4 - core index']
  #allocation1 [shape = 'u32[144,128]{1,0:T(1,128)}', space=vmem, size = 0x12000, scoped, tag = 'internal scratch']
  %s0 = inlined_call_operand.vmem [shape: f32[8,16], index: 0, kind: input, shape index: {}]
  %s1 = inlined_call_operand.vmem [shape: f32[8,1], index: 1, kind: input, shape index: {}]
  %s2 = inlined_call_operand.vmem [shape: f32[8,256], index: 2, kind: input, shape index: {}]
  %s3 = inlined_call_operand.vmem [shape: f32[88,8], index: 3, kind: input, shape index: {}]
  %s4 = inlined_call_operand.vmem [shape: f32[8,256], index: 4, kind: output, shape index: {}]
  %s5 = sld [smem:[#allocation0]]
  $region26: #{_fused_forward.1} parent=0
    _
  %s7 = ssub.s32 1, %s5
  %s8 = scalar_select 0, %s7, %s5
  // Predicated region
  $region2: #{_fused_forward.1} parent=0 // pred_check
    _
  $region3: #{_fused_forward.1} parent=0 // pred_check_branch
    %10 = sbr.rel (0) target = $region5
  $region4: #{_fused_forward.1} parent=0 // pred_region
    _
  $region5: #{_fused_forward.1} parent=0 // pred_fallthru
    _
  // Predicated region
  $region6: #{_fused_forward.1} parent=0 // pred_check
    _
  $region7: #{_fused_forward.1} parent=0 // pred_check_branch
    %12 = sbr.rel (0) target = $region9
  $region8: #{_fused_forward.1} parent=0 // pred_region
    _
  $region9: #{_fused_forward.1} parent=0 // pred_fallthru
    _
  // Predicated region
  $region10: #{_fused_forward.1} parent=0 // pred_check
    _
  $region11: #{_fused_forward.1} parent=0 // pred_check_branch
    %14 = sbr.rel (0) target = $region13
  $region12: #{_fused_forward.1} parent=0 // pred_region
    _
  $region13: #{_fused_forward.1} parent=0 // pred_fallthru
    _
  // Predicated region
  $region14: #{_fused_forward.1} parent=0 // pred_check
    _
  $region15: #{_fused_forward.1} parent=0 // pred_check_branch
    %16 = sbr.rel (0) target = $region17
  $region16: #{_fused_forward.1} parent=0 // pred_region
    _
  $region17: #{_fused_forward.1} parent=0 // pred_fallthru
    _
  %v17 = vld [vmem:[%s3] sm:$0xff]
  %v18 = vld [vmem:[%s3 + $0x8] sm:$0xff]
  %v19 = vld [vmem:[%s3 + $0x10] sm:$0xff]
  %v20 = vld [vmem:[%s3 + $0x18] sm:$0xff]
  %v21 = vld [vmem:[%s3 + $0x20] sm:$0xff]
  %v22 = vld [vmem:[%s3 + $0x28] sm:$0xff]
  %v23 = vld [vmem:[%s3 + $0x30] sm:$0x1]
  %v24 = vld [vmem:[%s3 + $0x38] sm:$0x1]
  %v25 = vld [vmem:[%s3 + $0x40] sm:$0xff]
  %v26 = vld [vmem:[%s3 + $0x48] sm:$0xff]
  %v27 = vld [vmem:[%s3 + $0x50] sm:$0xff]
  %v28 = vlaneseq
  %v29 = vand.u32 %v28, 127
  %vm30 = vcmp.ge.s32.totalorder %v29, 16
  %v31 = vsel %vm30, 1, 0
  %v32 = vcvt.s32.f32 %v31
  %v33 = vcvt.s32.f32 %v29
  %v34 = vmul.f32 %v32, 16.0
  %v35 = vsub.f32 %v33, %v34
  %v36 = vmul.f32 %v35, -0.5756463
  %v37 = vmul.f32 %v36, 1.442695
  %v38 = vpow.pop %v37
  %v39 = vld [vmem:[%s1] sm:$0xff]
  %41 = vset.pattern.permute.xlu0 0
  %42 = vperm.xlu0 %41, %v39
  %v43 = vpop.permute.xlu0 %42
  %v45 = vmul.f32 %v43, %v38
  %v46 = vmul.f32 %v32, 1.5707964
  %v47 = vadd.f32 %v45, %v46
  %v48 = vand.u32 2147483647, %v47
  %vm49 = vcmp.le.f32.partialorder %v48, 0.7853982
  %vm50 = vcmp.lt.s32.totalorder %v47, 0
  %v51 = vand.u32 %v47, 2139095040
  %v52 = vshrl.u32 %v51, 23
  %v53 = vsub.s32 %v52, 127
  %v54 = vand.u32 2147483647, %v47
  %v55 = vand.u32 %v54, 8388607
  %v56 = vor.u32 %v55, 8388608
  %v57 = vsub.s32 0, %v56
  %v58 = vadd.s32 %v53, 1
  %vm59 = vcmp.gt.s32.totalorder %v58, 0
  %v60 = vsel %vm59, %v58, 0
  %v61 = vshrl.u32 %v60, 5
  %v62 = vand.u32 %v60, 31
  %v63 = vsub.s32 32, %v62
  %v64 = vshrl.u32 683565275, %v63
  %v65 = vshll.u32 683565275, %v62
  %v66 = vshrl.u32 2475754826, %v63
  %v67 = vor.u32 %v65, %v66
  %v68 = vshll.u32 2475754826, %v62
  %v69 = vshrl.u32 2131351028, %v63
  %v70 = vor.u32 %v68, %v69
  %v71 = vshll.u32 2131351028, %v62
  %v72 = vshrl.u32 2102212464, %v63
  %v73 = vor.u32 %v71, %v72
  %v74 = vshll.u32 2102212464, %v62
  %v75 = vshrl.u32 920167782, %v63
  %v76 = vor.u32 %v74, %v75
  %v77 = vshll.u32 920167782, %v62
  %v78 = vshrl.u32 1326507024, %v63
  %v79 = vor.u32 %v77, %v78
  %vm80 = vcmp.lt.s32.totalorder %v61, 1
  %vm81 = vcmp.lt.s32.totalorder %v61, 2
  %vm82 = vcmp.lt.s32.totalorder %v61, 3
  %vm83 = vcmp.lt.s32.totalorder %v61, 4
  %v84 = vsel %vm80, %v64, %v67
  %v85 = vsel %vm83, %v73, 2102212464
  %v86 = vsel %vm82, %v70, %v85
  %v87 = vsel %vm81, %v84, %v86
  %v88 = vsel %vm80, %v67, %v70
  %v89 = vsel %vm83, %v76, 920167782
  %v90 = vsel %vm82, %v73, %v89
  %v91 = vsel %vm81, %v88, %v90
  %v92 = vsel %vm80, %v70, %v73
  %v93 = vsel %vm83, %v79, 1326507024
  %v94 = vsel %vm82, %v76, %v93
  %v95 = vsel %vm81, %v92, %v94
  %v96 = vshll.u32 %v56, 8
  %v97 = vmul.u32.u64.compose %v96, %v95
  %v98 = vextract.low.u32 %v97
  %v99 = vextract.high.u32 %v97
  %v100 = vmul.u32.u64.compose %v96, %v91
  %v101 = vextract.low.u32 %v100
  %v102 = vextract.high.u32 %v100
  %v103 = vmul.u32 %v96, %v87
  %v104 = vadd.s32 %v99, %v101
  %vm105 = vc.u32 %v99, %v101
  %v106 = vadd.s32 %v102, 1
  %v107 = vsel %vm105, %v106, %v102
  %v108 = vadd.s32 %v103, %v107
  %v109 = vadd.s32 %v108, 536870912
  %v110 = vshrl.u32 %v109, 30
  %v111 = vshll.u32 %v110, 30
  %v112 = vsub.s32 %v108, %v111
  %vm113 = vcmp.lt.s32.totalorder %v112, 0
  %v114 = vsub.s32 0, %v112
  %v115 = vsel %vm113, %v114, %v112
  %v116 = vclz %v115
  %v117 = vsub.s32 %v116, 2
  %vm118 = vcmp.gt.s32.totalorder 0, %v117
  %v119 = vsel %vm118, 0, %v117
  %v120 = vsub.s32 32, %v119
  %v121 = vshll.u32 %v112, %v119
  %v122 = vshrl.u32 %v104, %v120
  %v123 = vor.u32 %v121, %v122
  %v124 = vsub.s32 4294967266, %v119
  %v125 = vadd.s32 %v124, 127
  %v126 = vshll.u32 %v125, 23
  %v127 = vor.u32 4788187, %v126
  %v128 = vand.u32 2147483647, %v127
  %v130 = vcvt.s32.f32 %v123
  %v131 = vmul.f32 %v130, %v128
  %v132 = vxor.u32 %v131, 2147483648
  %v133 = vsel %vm50, %v132, %v131
  %v134 = vsub.s32 4, %v110
  %v135 = vsel %vm50, %v134, %v110
  %v136 = vsel %vm49, %v47, %v133
  %v137 = vsel %vm49, 0, %v135
  %v138 = vcosq.f32.pop %v136
  %v139 = vsinq.f32.pop %v136
  %vm140 = vweird.f32 %v47
  %v141 = vadd.s32 %v137, 3
  %v142 = vand.u32 %v141, 3
  %vm143 = vcmp.lt.s32.totalorder %v142, 2
  %vm144 = vcmp.eq.s32.totalorder %v142, 0
  %v145 = vxor.u32 %v139, 2147483648
  %v146 = vsel %vm144, %v138, %v145
  %vm147 = vcmp.eq.s32.totalorder %v142, 2
  %v148 = vxor.u32 %v138, 2147483648
  %v149 = vsel %vm147, %v148, %v139
  %v150 = vsel %vm143, %v146, %v149
  %v151 = vsel %vm140, nan, %v150
  %v152 = vld [vmem:[%s0] sm:$0xff]
  %vm153 = vcmask 261120
  %v155 = vsel %vm153, %v151, 0
  %157 = vmatprep.subr.mxu0 0.0
  %v158 = vand.u32 %v19, 4294901760
  %159 = vmatpush1.msra.mxu0 %v158
  %160 = vmatprep.subr.mxu0 0.0
  %v161 = vand.u32 %v20, 4294901760
  %162 = vmatpush1.msra.mxu0 %v161
  %163 = vmatprep.subr.mxu0 0.0
  %v164 = vand.u32 %v21, 4294901760
  %165 = vmatpush1.msra.mxu0 %v164
  %166 = vmatprep.subr.mxu0 0.0
  %v167 = vand.u32 %v22, 4294901760
  %168 = vmatpush1.msra.mxu0 %v167
  %169 = vmatprep.subr.mxu0 0.0
  %170 = vmatpush1.msra.mxu0 0.0
  %171 = vmatprep.subr.mxu0 0.0
  %172 = vmatpush1.msra.mxu0 0.0
  %173 = vmatprep.subr.mxu0 0.0
  %174 = vmatpush1.msra.mxu0 0.0
  %175 = vmatprep.subr.mxu0 0.0
  %176 = vmatpush1.msra.mxu0 0.0
  %177 = vmatprep.subr.mxu0 0.0
  %178 = vmatpush1.msra.mxu0 0.0
  %179 = vmatprep.subr.mxu0 0.0
  %180 = vmatpush1.msra.mxu0 0.0
  %181 = vmatprep.subr.mxu0 0.0
  %182 = vmatpush1.msra.mxu0 0.0
  %183 = vmatprep.subr.mxu0 0.0
  %184 = vmatpush1.msra.mxu0 0.0
  %185 = vmatprep.subr.mxu0 0.0
  %186 = vmatpush1.msra.mxu0 0.0
  %187 = vmatprep.subr.mxu0 0.0
  %188 = vmatpush1.msra.mxu0 0.0
  %189 = vmatprep.subr.mxu0 0.0
  %190 = vmatpush1.msra.mxu0 0.0
  %191 = vmatprep.subr.mxu0 0.0
  %192 = vmatpush1.msra.mxu0 0.0
  %193 = vmatprep.subr.mxu0 0.0
  %194 = vmatpush1.msra.mxu0 0.0
  %195 = vmatprep.subr.mxu0 0.0
  %196 = vmatpush1.msra.mxu0 0.0
  %197 = vmatprep.subr.mxu0 0.0
  %198 = vmatpush1.msra.mxu0 0.0
  %199 = vmatprep.subr.mxu0 0.0
  %200 = vmatpush1.msra.mxu0 0.0
  %201 = vmatprep.subr.mxu0 0.0
  %202 = vmatpush1.msra.mxu0 0.0
  %203 = vmatprep.subr.mxu0 0.0
  %204 = vmatpush1.msra.mxu0 0.0
  %205 = vmatprep.subr.mxu0 0.0
  %206 = vmatpush1.msra.mxu0 0.0
  %207 = vmatprep.subr.mxu0 0.0
  %208 = vmatpush1.msra.mxu0 0.0
  %209 = vmatprep.subr.mxu0 0.0
  %210 = vmatpush1.msra.mxu0 0.0
  %211 = vmatprep.subr.mxu0 0.0
  %212 = vmatpush1.msra.mxu0 0.0
  %213 = vmatprep.subr.mxu0 0.0
  %214 = vmatpush1.msra.mxu0 0.0
  %215 = vmatprep.subr.mxu0 0.0
  %216 = vmatpush1.msra.mxu0 0.0
  %217 = vmatprep.subr.mxu0 0.0
  %218 = vmatpush1.msra.mxu0 0.0
  %219 = vmatprep.subr.mxu0 0.0
  %220 = vmatpush1.msra.mxu0 0.0
  %221 = vmatprep.subr.mxu0 0.0
  %222 = vmatpush1.msra.mxu0 0.0
  %223 = vmatprep.subr.mxu0 0.0
  %224 = vmatpush1.msra.mxu0 0.0
  %225 = vmatprep.mubr.f32.mxu0 0.0
  %v226 = vand.u32 %v155, 4294901760
  %v227 = vsub.f32 %v155, %v226
  %v228 = vand.u32 %v227, 4294901760
  %v229 = vsub.f32 %v227, %v228
  %v230 = vand.u32 %v229, 4294901760
  %231 = vmatmul.mubr.f32.gmra.mrb[0].mxu0 %v230
  %v232 = vpop.f32.mrb[0].mxu0
  %v233 = vadd.f32 0.0, %v232
  %v234 = vpop.f32.mrb[0].mxu0
  %235 = vdwg.mxu0
  %236 = vmatprep.subr.mxu0 0.0
  %v237 = vand.u32 %v19, 4294901760
  %v238 = vsub.f32 %v19, %v237
  %v239 = vand.u32 %v238, 4294901760
  %v240 = vsub.f32 %v238, %v239
  %v241 = vand.u32 %v240, 4294901760
  %242 = vmatpush1.msra.mxu0 %v241
  %243 = vmatprep.subr.mxu0 0.0
  %v244 = vand.u32 %v20, 4294901760
  %v245 = vsub.f32 %v20, %v244
  %v246 = vand.u32 %v245, 4294901760
  %v247 = vsub.f32 %v245, %v246
  %v248 = vand.u32 %v247, 4294901760
  %249 = vmatpush1.msra.mxu0 %v248
  %250 = vmatprep.subr.mxu0 0.0
  %v251 = vand.u32 %v21, 4294901760
  %v252 = vsub.f32 %v21, %v251
  %v253 = vand.u32 %v252, 4294901760
  %v254 = vsub.f32 %v252, %v253
  %v255 = vand.u32 %v254, 4294901760
  %256 = vmatpush1.msra.mxu0 %v255
  %257 = vmatprep.subr.mxu0 0.0
  %v258 = vand.u32 %v22, 4294901760
  %v259 = vsub.f32 %v22, %v258
  %v260 = vand.u32 %v259, 4294901760
  %v261 = vsub.f32 %v259, %v260
  %v262 = vand.u32 %v261, 4294901760
  %263 = vmatpush1.msra.mxu0 %v262
  %264 = vmatprep.subr.mxu0 0.0
  %265 = vmatpush1.msra.mxu0 0.0
  %266 = vmatprep.subr.mxu0 0.0
  %267 = vmatpush1.msra.mxu0 0.0
  %268 = vmatprep.subr.mxu0 0.0
  %269 = vmatpush1.msra.mxu0 0.0
  %270 = vmatprep.subr.mxu0 0.0
  %271 = vmatpush1.msra.mxu0 0.0
  %272 = vmatprep.subr.mxu0 0.0
  %273 = vmatpush1.msra.mxu0 0.0
  %274 = vmatprep.subr.mxu0 0.0
  %275 = vmatpush1.msra.mxu0 0.0
  %276 = vmatprep.subr.mxu0 0.0
  %277 = vmatpush1.msra.mxu0 0.0
  %278 = vmatprep.subr.mxu0 0.0
  %279 = vmatpush1.msra.mxu0 0.0
  %280 = vmatprep.subr.mxu0 0.0
  %281 = vmatpush1.msra.mxu0 0.0
  %282 = vmatprep.subr.mxu0 0.0
  %283 = vmatpush1.msra.mxu0 0.0
  %284 = vmatprep.subr.mxu0 0.0
  %285 = vmatpush1.msra.mxu0 0.0
  %286 = vmatprep.subr.mxu0 0.0
  %287 = vmatpush1.msra.mxu0 0.0
  %288 = vmatprep.subr.mxu0 0.0
  %289 = vmatpush1.msra.mxu0 0.0
  %290 = vmatprep.subr.mxu0 0.0
  %291 = vmatpush1.msra.mxu0 0.0
  %292 = vmatprep.subr.mxu0 0.0
  %293 = vmatpush1.msra.mxu0 0.0
  %294 = vmatprep.subr.mxu0 0.0
  %295 = vmatpush1.msra.mxu0 0.0
  %296 = vmatprep.subr.mxu0 0.0
  %297 = vmatpush1.msra.mxu0 0.0
  %298 = vmatprep.subr.mxu0 0.0
  %299 = vmatpush1.msra.mxu0 0.0
  %300 = vmatprep.subr.mxu0 0.0
  %301 = vmatpush1.msra.mxu0 0.0
  %302 = vmatprep.subr.mxu0 0.0
  %303 = vmatpush1.msra.mxu0 0.0
  %304 = vmatprep.subr.mxu0 0.0
  %305 = vmatpush1.msra.mxu0 0.0
  %306 = vmatprep.subr.mxu0 0.0
  %307 = vmatpush1.msra.mxu0 0.0
  %308 = vmatprep.subr.mxu0 0.0
  %309 = vmatpush1.msra.mxu0 0.0
  %310 = vmatprep.subr.mxu0 0.0
  %311 = vmatpush1.msra.mxu0 0.0
  %312 = vmatprep.subr.mxu0 0.0
  %313 = vmatpush1.msra.mxu0 0.0
  %314 = vmatprep.subr.mxu0 0.0
  %315 = vmatpush1.msra.mxu0 0.0
  %316 = vmatprep.subr.mxu0 0.0
  %317 = vmatpush1.msra.mxu0 0.0
  %318 = vmatprep.subr.mxu0 0.0
  %319 = vmatpush1.msra.mxu0 0.0
  %320 = vmatprep.mubr.f32.mxu0 0.0
  %v321 = vand.u32 %v155, 4294901760
  %322 = vmatmul.mubr.f32.gmra.mrb[0].mxu0 %v321
  %v323 = vpop.f32.mrb[0].mxu0
  %v324 = vadd.f32 %v233, %v323
  %v325 = vpop.f32.mrb[0].mxu0
  %326 = vdwg.mxu0
  %327 = vmatprep.subr.mxu0 0.0
  %v328 = vand.u32 %v19, 4294901760
  %v329 = vsub.f32 %v19, %v328
  %330 = vmatpush1.msra.mxu0 %v329
  %331 = vmatprep.subr.mxu0 0.0
  %v332 = vand.u32 %v20, 4294901760
  %v333 = vsub.f32 %v20, %v332
  %334 = vmatpush1.msra.mxu0 %v333
  %335 = vmatprep.subr.mxu0 0.0
  %v336 = vand.u32 %v21, 4294901760
  %v337 = vsub.f32 %v21, %v336
  %338 = vmatpush1.msra.mxu0 %v337
  %339 = vmatprep.subr.mxu0 0.0
  %v340 = vand.u32 %v22, 4294901760
  %v341 = vsub.f32 %v22, %v340
  %342 = vmatpush1.msra.mxu0 %v341
  %343 = vmatprep.subr.mxu0 0.0
  %344 = vmatpush1.msra.mxu0 0.0
  %345 = vmatprep.subr.mxu0 0.0
  %346 = vmatpush1.msra.mxu0 0.0
  %347 = vmatprep.subr.mxu0 0.0
  %348 = vmatpush1.msra.mxu0 0.0
  %349 = vmatprep.subr.mxu0 0.0
  %350 = vmatpush1.msra.mxu0 0.0
  %351 = vmatprep.subr.mxu0 0.0
  %352 = vmatpush1.msra.mxu0 0.0
  %353 = vmatprep.subr.mxu0 0.0
  %354 = vmatpush1.msra.mxu0 0.0
  %355 = vmatprep.subr.mxu0 0.0
  %356 = vmatpush1.msra.mxu0 0.0
  %357 = vmatprep.subr.mxu0 0.0
  %358 = vmatpush1.msra.mxu0 0.0
  %359 = vmatprep.subr.mxu0 0.0
  %360 = vmatpush1.msra.mxu0 0.0
  %361 = vmatprep.subr.mxu0 0.0
  %362 = vmatpush1.msra.mxu0 0.0
  %363 = vmatprep.subr.mxu0 0.0
  %364 = vmatpush1.msra.mxu0 0.0
  %365 = vmatprep.subr.mxu0 0.0
  %366 = vmatpush1.msra.mxu0 0.0
  %367 = vmatprep.subr.mxu0 0.0
  %368 = vmatpush1.msra.mxu0 0.0
  %369 = vmatprep.subr.mxu0 0.0
  %370 = vmatpush1.msra.mxu0 0.0
  %371 = vmatprep.subr.mxu0 0.0
  %372 = vmatpush1.msra.mxu0 0.0
  %373 = vmatprep.subr.mxu0 0.0
  %374 = vmatpush1.msra.mxu0 0.0
  %375 = vmatprep.subr.mxu0 0.0
  %376 = vmatpush1.msra.mxu0 0.0
  %377 = vmatprep.subr.mxu0 0.0
  %378 = vmatpush1.msra.mxu0 0.0
  %379 = vmatprep.subr.mxu0 0.0
  %380 = vmatpush1.msra.mxu0 0.0
  %381 = vmatprep.subr.mxu0 0.0
  %382 = vmatpush1.msra.mxu0 0.0
  %383 = vmatprep.subr.mxu0 0.0
  %384 = vmatpush1.msra.mxu0 0.0
  %385 = vmatprep.subr.mxu0 0.0
  %386 = vmatpush1.msra.mxu0 0.0
  %387 = vmatprep.subr.mxu0 0.0
  %388 = vmatpush1.msra.mxu0 0.0
  %389 = vmatprep.subr.mxu0 0.0
  %390 = vmatpush1.msra.mxu0 0.0
  %391 = vmatprep.subr.mxu0 0.0
  %392 = vmatpush1.msra.mxu0 0.0
  %393 = vmatprep.subr.mxu0 0.0
  %394 = vmatpush1.msra.mxu0 0.0
  %395 = vmatprep.subr.mxu0 0.0
  %396 = vmatpush1.msra.mxu0 0.0
  %397 = vmatprep.subr.mxu0 0.0
  %398 = vmatpush1.msra.mxu0 0.0
  %399 = vmatprep.mubr.f32.mxu0 0.0
  %v400 = vand.u32 %v155, 4294901760
  %v401 = vsub.f32 %v155, %v400
  %402 = vmatmul.mubr.f32.gmra.mrb[0].mxu0 %v401
  %v403 = vpop.f32.mrb[0].mxu0
  %v404 = vadd.f32 %v324, %v403
  %v405 = vpop.f32.mrb[0].mxu0
  %406 = vdwg.mxu0
  %407 = vmatprep.subr.mxu0 0.0
  %v408 = vand.u32 %v19, 4294901760
  %409 = vmatpush1.msra.mxu0 %v408
  %410 = vmatprep.subr.mxu0 0.0
  %v411 = vand.u32 %v20, 4294901760
  %412 = vmatpush1.msra.mxu0 %v411
  %413 = vmatprep.subr.mxu0 0.0
  %v414 = vand.u32 %v21, 4294901760
  %415 = vmatpush1.msra.mxu0 %v414
  %416 = vmatprep.subr.mxu0 0.0
  %v417 = vand.u32 %v22, 4294901760
  %418 = vmatpush1.msra.mxu0 %v417
  %419 = vmatprep.subr.mxu0 0.0
  %420 = vmatpush1.msra.mxu0 0.0
  %421 = vmatprep.subr.mxu0 0.0
  %422 = vmatpush1.msra.mxu0 0.0
  %423 = vmatprep.subr.mxu0 0.0
  %424 = vmatpush1.msra.mxu0 0.0
  %425 = vmatprep.subr.mxu0 0.0
  %426 = vmatpush1.msra.mxu0 0.0
  %427 = vmatprep.subr.mxu0 0.0
  %428 = vmatpush1.msra.mxu0 0.0
  %429 = vmatprep.subr.mxu0 0.0
  %430 = vmatpush1.msra.mxu0 0.0
  %431 = vmatprep.subr.mxu0 0.0
  %432 = vmatpush1.msra.mxu0 0.0
  %433 = vmatprep.subr.mxu0 0.0
  %434 = vmatpush1.msra.mxu0 0.0
  %435 = vmatprep.subr.mxu0 0.0
  %436 = vmatpush1.msra.mxu0 0.0
  %437 = vmatprep.subr.mxu0 0.0
  %438 = vmatpush1.msra.mxu0 0.0
  %439 = vmatprep.subr.mxu0 0.0
  %440 = vmatpush1.msra.mxu0 0.0
  %441 = vmatprep.subr.mxu0 0.0
  %442 = vmatpush1.msra.mxu0 0.0
  %443 = vmatprep.subr.mxu0 0.0
  %444 = vmatpush1.msra.mxu0 0.0
  %445 = vmatprep.subr.mxu0 0.0
  %446 = vmatpush1.msra.mxu0 0.0
  %447 = vmatprep.subr.mxu0 0.0
  %448 = vmatpush1.msra.mxu0 0.0
  %449 = vmatprep.subr.mxu0 0.0
  %450 = vmatpush1.msra.mxu0 0.0
  %451 = vmatprep.subr.mxu0 0.0
  %452 = vmatpush1.msra.mxu0 0.0
  %453 = vmatprep.subr.mxu0 0.0
  %454 = vmatpush1.msra.mxu0 0.0
  %455 = vmatprep.subr.mxu0 0.0
  %456 = vmatpush1.msra.mxu0 0.0
  %457 = vmatprep.subr.mxu0 0.0
  %458 = vmatpush1.msra.mxu0 0.0
  %459 = vmatprep.subr.mxu0 0.0
  %460 = vmatpush1.msra.mxu0 0.0
  %461 = vmatprep.subr.mxu0 0.0
  %462 = vmatpush1.msra.mxu0 0.0
  %463 = vmatprep.subr.mxu0 0.0
  %464 = vmatpush1.msra.mxu0 0.0
  %465 = vmatprep.subr.mxu0 0.0
  %466 = vmatpush1.msra.mxu0 0.0
  %467 = vmatprep.subr.mxu0 0.0
  %468 = vmatpush1.msra.mxu0 0.0
  %469 = vmatprep.subr.mxu0 0.0
  %470 = vmatpush1.msra.mxu0 0.0
  %471 = vmatprep.subr.mxu0 0.0
  %472 = vmatpush1.msra.mxu0 0.0
  %473 = vmatprep.subr.mxu0 0.0
  %474 = vmatpush1.msra.mxu0 0.0
  %475 = vmatprep.mubr.f32.mxu0 0.0
  %v476 = vand.u32 %v155, 4294901760
  %v477 = vsub.f32 %v155, %v476
  %v478 = vand.u32 %v477, 4294901760
  %479 = vmatmul.mubr.f32.gmra.mrb[0].mxu0 %v478
  %v480 = vpop.f32.mrb[0].mxu0
  %v481 = vadd.f32 %v404, %v480
  %v482 = vpop.f32.mrb[0].mxu0
  %483 = vdwg.mxu0
  %484 = vmatprep.subr.mxu0 0.0
  %v485 = vand.u32 %v19, 4294901760
  %v486 = vsub.f32 %v19, %v485
  %v487 = vand.u32 %v486, 4294901760
  %488 = vmatpush1.msra.mxu0 %v487
  %489 = vmatprep.subr.mxu0 0.0
  %v490 = vand.u32 %v20, 4294901760
  %v491 = vsub.f32 %v20, %v490
  %v492 = vand.u32 %v491, 4294901760
  %493 = vmatpush1.msra.mxu0 %v492
  %494 = vmatprep.subr.mxu0 0.0
  %v495 = vand.u32 %v21, 4294901760
  %v496 = vsub.f32 %v21, %v495
  %v497 = vand.u32 %v496, 4294901760
  %498 = vmatpush1.msra.mxu0 %v497
  %499 = vmatprep.subr.mxu0 0.0
  %v500 = vand.u32 %v22, 4294901760
  %v501 = vsub.f32 %v22, %v500
  %v502 = vand.u32 %v501, 4294901760
  %503 = vmatpush1.msra.mxu0 %v502
  %504 = vmatprep.subr.mxu0 0.0
  %505 = vmatpush1.msra.mxu0 0.0
  %506 = vmatprep.subr.mxu0 0.0
  %507 = vmatpush1.msra.mxu0 0.0
  %508 = vmatprep.subr.mxu0 0.0
  %509 = vmatpush1.msra.mxu0 0.0
  %510 = vmatprep.subr.mxu0 0.0
  %511 = vmatpush1.msra.mxu0 0.0
  %512 = vmatprep.subr.mxu0 0.0
  %513 = vmatpush1.msra.mxu0 0.0
  %514 = vmatprep.subr.mxu0 0.0
  %515 = vmatpush1.msra.mxu0 0.0
  %516 = vmatprep.subr.mxu0 0.0
  %517 = vmatpush1.msra.mxu0 0.0
  %518 = vmatprep.subr.mxu0 0.0
  %519 = vmatpush1.msra.mxu0 0.0
  %520 = vmatprep.subr.mxu0 0.0
  %521 = vmatpush1.msra.mxu0 0.0
  %522 = vmatprep.subr.mxu0 0.0
  %523 = vmatpush1.msra.mxu0 0.0
  %524 = vmatprep.subr.mxu0 0.0
  %525 = vmatpush1.msra.mxu0 0.0
  %526 = vmatprep.subr.mxu0 0.0
  %527 = vmatpush1.msra.mxu0 0.0
  %528 = vmatprep.subr.mxu0 0.0
  %529 = vmatpush1.msra.mxu0 0.0
  %530 = vmatprep.subr.mxu0 0.0
  %531 = vmatpush1.msra.mxu0 0.0
  %532 = vmatprep.subr.mxu0 0.0
  %533 = vmatpush1.msra.mxu0 0.0
  %534 = vmatprep.subr.mxu0 0.0
  %535 = vmatpush1.msra.mxu0 0.0
  %536 = vmatprep.subr.mxu0 0.0
  %537 = vmatpush1.msra.mxu0 0.0
  %538 = vmatprep.subr.mxu0 0.0
  %539 = vmatpush1.msra.mxu0 0.0
  %540 = vmatprep.subr.mxu0 0.0
  %541 = vmatpush1.msra.mxu0 0.0
  %542 = vmatprep.subr.mxu0 0.0
  %543 = vmatpush1.msra.mxu0 0.0
  %544 = vmatprep.subr.mxu0 0.0
  %545 = vmatpush1.msra.mxu0 0.0
  %546 = vmatprep.subr.mxu0 0.0
  %547 = vmatpush1.msra.mxu0 0.0
  %548 = vmatprep.subr.mxu0 0.0
  %549 = vmatpush1.msra.mxu0 0.0
  %550 = vmatprep.subr.mxu0 0.0
  %551 = vmatpush1.msra.mxu0 0.0
  %552 = vmatprep.subr.mxu0 0.0
  %553 = vmatpush1.msra.mxu0 0.0
  %554 = vmatprep.subr.mxu0 0.0
  %555 = vmatpush1.msra.mxu0 0.0
  %556 = vmatprep.subr.mxu0 0.0
  %557 = vmatpush1.msra.mxu0 0.0
  %558 = vmatprep.subr.mxu0 0.0
  %559 = vmatpush1.msra.mxu0 0.0
  %560 = vmatprep.mubr.f32.mxu0 0.0
  %v561 = vand.u32 %v155, 4294901760
  %562 = vmatmul.mubr.f32.gmra.mrb[0].mxu0 %v561
  %v563 = vpop.f32.mrb[0].mxu0
  %v564 = vadd.f32 %v481, %v563
  %v565 = vpop.f32.mrb[0].mxu0
  %566 = vdwg.mxu0
  %567 = vmatprep.subr.mxu0 0.0
  %v568 = vand.u32 %v19, 4294901760
  %569 = vmatpush1.msra.mxu0 %v568
  %570 = vmatprep.subr.mxu0 0.0
  %v571 = vand.u32 %v20, 4294901760
  %572 = vmatpush1.msra.mxu0 %v571
  %573 = vmatprep.subr.mxu0 0.0
  %v574 = vand.u32 %v21, 4294901760
  %575 = vmatpush1.msra.mxu0 %v574
  %576 = vmatprep.subr.mxu0 0.0
  %v577 = vand.u32 %v22, 4294901760
  %578 = vmatpush1.msra.mxu0 %v577
  %579 = vmatprep.subr.mxu0 0.0
  %580 = vmatpush1.msra.mxu0 0.0
  %581 = vmatprep.subr.mxu0 0.0
  %582 = vmatpush1.msra.mxu0 0.0
  %583 = vmatprep.subr.mxu0 0.0
  %584 = vmatpush1.msra.mxu0 0.0
  %585 = vmatprep.subr.mxu0 0.0
  %586 = vmatpush1.msra.mxu0 0.0
  %587 = vmatprep.subr.mxu0 0.0
  %588 = vmatpush1.msra.mxu0 0.0
  %589 = vmatprep.subr.mxu0 0.0
  %590 = vmatpush1.msra.mxu0 0.0
  %591 = vmatprep.subr.mxu0 0.0
  %592 = vmatpush1.msra.mxu0 0.0
  %593 = vmatprep.subr.mxu0 0.0
  %594 = vmatpush1.msra.mxu0 0.0
  %595 = vmatprep.subr.mxu0 0.0
  %596 = vmatpush1.msra.mxu0 0.0
  %597 = vmatprep.subr.mxu0 0.0
  %598 = vmatpush1.msra.mxu0 0.0
  %599 = vmatprep.subr.mxu0 0.0
  %600 = vmatpush1.msra.mxu0 0.0
  %601 = vmatprep.subr.mxu0 0.0
  %602 = vmatpush1.msra.mxu0 0.0
  %603 = vmatprep.subr.mxu0 0.0
  %604 = vmatpush1.msra.mxu0 0.0
  %605 = vmatprep.subr.mxu0 0.0
  %606 = vmatpush1.msra.mxu0 0.0
  %607 = vmatprep.subr.mxu0 0.0
  %608 = vmatpush1.msra.mxu0 0.0
  %609 = vmatprep.subr.mxu0 0.0
  %610 = vmatpush1.msra.mxu0 0.0
  %611 = vmatprep.subr.mxu0 0.0
  %612 = vmatpush1.msra.mxu0 0.0
  %613 = vmatprep.subr.mxu0 0.0
  %614 = vmatpush1.msra.mxu0 0.0
  %615 = vmatprep.subr.mxu0 0.0
  %616 = vmatpush1.msra.mxu0 0.0
  %617 = vmatprep.subr.mxu0 0.0
  %618 = vmatpush1.msra.mxu0 0.0
  %619 = vmatprep.subr.mxu0 0.0
  %620 = vmatpush1.msra.mxu0 0.0
  %621 = vmatprep.subr.mxu0 0.0
  %622 = vmatpush1.msra.mxu0 0.0
  %623 = vmatprep.subr.mxu0 0.0
  %624 = vmatpush1.msra.mxu0 0.0
  %625 = vmatprep.subr.mxu0 0.0
  %626 = vmatpush1.msra.mxu0 0.0
  %627 = vmatprep.subr.mxu0 0.0
  %628 = vmatpush1.msra.mxu0 0.0
  %629 = vmatprep.subr.mxu0 0.0
  %630 = vmatpush1.msra.mxu0 0.0
  %631 = vmatprep.subr.mxu0 0.0
  %632 = vmatpush1.msra.mxu0 0.0
  %633 = vmatprep.subr.mxu0 0.0
  %634 = vmatpush1.msra.mxu0 0.0
  %635 = vmatprep.mubr.f32.mxu0 0.0
  %v636 = vand.u32 %v155, 4294901760
  %637 = vmatmul.mubr.f32.gmra.mrb[0].mxu0 %v636
  %v638 = vpop.f32.mrb[0].mxu0
  %v639 = vadd.f32 %v564, %v638
  %v640 = vpop.f32.mrb[0].mxu0
  %641 = vdwg.mxu0
  %vm642 = vcmask 130048
  %v644 = vsel %vm642, %v152, 0
  %646 = vmatprep.subr.mxu0 0.0
  %v647 = vand.u32 %v17, 4294901760
  %648 = vmatpush1.msra.mxu0 %v647
  %649 = vmatprep.subr.mxu0 0.0
  %v650 = vand.u32 %v18, 4294901760
  %651 = vmatpush1.msra.mxu0 %v650
  %652 = vmatprep.subr.mxu0 0.0
  %653 = vmatpush1.msra.mxu0 0.0
  %654 = vmatprep.subr.mxu0 0.0
  %655 = vmatpush1.msra.mxu0 0.0
  %656 = vmatprep.subr.mxu0 0.0
  %657 = vmatpush1.msra.mxu0 0.0
  %658 = vmatprep.subr.mxu0 0.0
  %659 = vmatpush1.msra.mxu0 0.0
  %660 = vmatprep.subr.mxu0 0.0
  %661 = vmatpush1.msra.mxu0 0.0
  %662 = vmatprep.subr.mxu0 0.0
  %663 = vmatpush1.msra.mxu0 0.0
  %664 = vmatprep.subr.mxu0 0.0
  %665 = vmatpush1.msra.mxu0 0.0
  %666 = vmatprep.subr.mxu0 0.0
  %667 = vmatpush1.msra.mxu0 0.0
  %668 = vmatprep.subr.mxu0 0.0
  %669 = vmatpush1.msra.mxu0 0.0
  %670 = vmatprep.subr.mxu0 0.0
  %671 = vmatpush1.msra.mxu0 0.0
  %672 = vmatprep.subr.mxu0 0.0
  %673 = vmatpush1.msra.mxu0 0.0
  %674 = vmatprep.subr.mxu0 0.0
  %675 = vmatpush1.msra.mxu0 0.0
  %676 = vmatprep.subr.mxu0 0.0
  %677 = vmatpush1.msra.mxu0 0.0
  %678 = vmatprep.subr.mxu0 0.0
  %679 = vmatpush1.msra.mxu0 0.0
  %680 = vmatprep.subr.mxu0 0.0
  %681 = vmatpush1.msra.mxu0 0.0
  %682 = vmatprep.subr.mxu0 0.0
  %683 = vmatpush1.msra.mxu0 0.0
  %684 = vmatprep.subr.mxu0 0.0
  %685 = vmatpush1.msra.mxu0 0.0
  %686 = vmatprep.subr.mxu0 0.0
  %687 = vmatpush1.msra.mxu0 0.0
  %688 = vmatprep.subr.mxu0 0.0
  %689 = vmatpush1.msra.mxu0 0.0
  %690 = vmatprep.subr.mxu0 0.0
  %691 = vmatpush1.msra.mxu0 0.0
  %692 = vmatprep.subr.mxu0 0.0
  %693 = vmatpush1.msra.mxu0 0.0
  %694 = vmatprep.subr.mxu0 0.0
  %695 = vmatpush1.msra.mxu0 0.0
  %696 = vmatprep.subr.mxu0 0.0
  %697 = vmatpush1.msra.mxu0 0.0
  %698 = vmatprep.subr.mxu0 0.0
  %699 = vmatpush1.msra.mxu0 0.0
  %700 = vmatprep.subr.mxu0 0.0
  %701 = vmatpush1.msra.mxu0 0.0
  %702 = vmatprep.subr.mxu0 0.0
  %703 = vmatpush1.msra.mxu0 0.0
  %704 = vmatprep.subr.mxu0 0.0
  %705 = vmatpush1.msra.mxu0 0.0
  %706 = vmatprep.subr.mxu0 0.0
  %707 = vmatpush1.msra.mxu0 0.0
  %708 = vmatprep.subr.mxu0 0.0
  %709 = vmatpush1.msra.mxu0 0.0
  %710 = vmatprep.subr.mxu0 0.0
  %711 = vmatpush1.msra.mxu0 0.0
  %712 = vmatprep.mubr.f32.mxu0 0.0
  %v713 = vand.u32 %v644, 4294901760
  %v714 = vsub.f32 %v644, %v713
  %v715 = vand.u32 %v714, 4294901760
  %v716 = vsub.f32 %v714, %v715
  %v717 = vand.u32 %v716, 4294901760
  %718 = vmatmul.mubr.f32.gmra.mrb[0].mxu0 %v717
  %v719 = vpop.f32.mrb[0].mxu0
  %v720 = vadd.f32 %v639, %v719
  %v721 = vpop.f32.mrb[0].mxu0
  %722 = vdwg.mxu0
  %723 = vmatprep.subr.mxu0 0.0
  %v724 = vand.u32 %v17, 4294901760
  %v725 = vsub.f32 %v17, %v724
  %v726 = vand.u32 %v725, 4294901760
  %v727 = vsub.f32 %v725, %v726
  %v728 = vand.u32 %v727, 4294901760
  %729 = vmatpush1.msra.mxu0 %v728
  %730 = vmatprep.subr.mxu0 0.0
  %v731 = vand.u32 %v18, 4294901760
  %v732 = vsub.f32 %v18, %v731
  %v733 = vand.u32 %v732, 4294901760
  %v734 = vsub.f32 %v732, %v733
  %v735 = vand.u32 %v734, 4294901760
  %736 = vmatpush1.msra.mxu0 %v735
  %737 = vmatprep.subr.mxu0 0.0
  %738 = vmatpush1.msra.mxu0 0.0
  %739 = vmatprep.subr.mxu0 0.0
  %740 = vmatpush1.msra.mxu0 0.0
  %741 = vmatprep.subr.mxu0 0.0
  %742 = vmatpush1.msra.mxu0 0.0
  %743 = vmatprep.subr.mxu0 0.0
  %744 = vmatpush1.msra.mxu0 0.0
  %745 = vmatprep.subr.mxu0 0.0
  %746 = vmatpush1.msra.mxu0 0.0
  %747 = vmatprep.subr.mxu0 0.0
  %748 = vmatpush1.msra.mxu0 0.0
  %749 = vmatprep.subr.mxu0 0.0
  %750 = vmatpush1.msra.mxu0 0.0
  %751 = vmatprep.subr.mxu0 0.0
  %752 = vmatpush1.msra.mxu0 0.0
  %753 = vmatprep.subr.mxu0 0.0
  %754 = vmatpush1.msra.mxu0 0.0
  %755 = vmatprep.subr.mxu0 0.0
  %756 = vmatpush1.msra.mxu0 0.0
  %757 = vmatprep.subr.mxu0 0.0
  %758 = vmatpush1.msra.mxu0 0.0
  %759 = vmatprep.subr.mxu0 0.0
  %760 = vmatpush1.msra.mxu0 0.0
  %761 = vmatprep.subr.mxu0 0.0
  %762 = vmatpush1.msra.mxu0 0.0
  %763 = vmatprep.subr.mxu0 0.0
  %764 = vmatpush1.msra.mxu0 0.0
  %765 = vmatprep.subr.mxu0 0.0
  %766 = vmatpush1.msra.mxu0 0.0
  %767 = vmatprep.subr.mxu0 0.0
  %768 = vmatpush1.msra.mxu0 0.0
  %769 = vmatprep.subr.mxu0 0.0
  %770 = vmatpush1.msra.mxu0 0.0
  %771 = vmatprep.subr.mxu0 0.0
  %772 = vmatpush1.msra.mxu0 0.0
  %773 = vmatprep.subr.mxu0 0.0
  %774 = vmatpush1.msra.mxu0 0.0
  %775 = vmatprep.subr.mxu0 0.0
  %776 = vmatpush1.msra.mxu0 0.0
  %777 = vmatprep.subr.mxu0 0.0
  %778 = vmatpush1.msra.mxu0 0.0
  %779 = vmatprep.subr.mxu0 0.0
  %780 = vmatpush1.msra.mxu0 0.0
  %781 = vmatprep.subr.mxu0 0.0
  %782 = vmatpush1.msra.mxu0 0.0
  %783 = vmatprep.subr.mxu0 0.0
  %784 = vmatpush1.msra.mxu0 0.0
  %785 = vmatprep.subr.mxu0 0.0
  %786 = vmatpush1.msra.mxu0 0.0
  %787 = vmatprep.subr.mxu0 0.0
  %788 = vmatpush1.msra.mxu0 0.0
  %789 = vmatprep.subr.mxu0 0.0
  %790 = vmatpush1.msra.mxu0 0.0
  %791 = vmatprep.subr.mxu0 0.0
  %792 = vmatpush1.msra.mxu0 0.0
  %793 = vmatprep.subr.mxu0 0.0
  %794 = vmatpush1.msra.mxu0 0.0
  %795 = vmatprep.subr.mxu0 0.0
  %796 = vmatpush1.msra.mxu0 0.0
  %797 = vmatprep.mubr.f32.mxu0 0.0
  %v798 = vand.u32 %v644, 4294901760
  %799 = vmatmul.mubr.f32.gmra.mrb[0].mxu0 %v798
  %v800 = vpop.f32.mrb[0].mxu0
  %v801 = vadd.f32 %v720, %v800
  %v802 = vpop.f32.mrb[0].mxu0
  %803 = vdwg.mxu0
  %804 = vmatprep.subr.mxu0 0.0
  %v805 = vand.u32 %v17, 4294901760
  %v806 = vsub.f32 %v17, %v805
  %807 = vmatpush1.msra.mxu0 %v806
  %808 = vmatprep.subr.mxu0 0.0
  %v809 = vand.u32 %v18, 4294901760
  %v810 = vsub.f32 %v18, %v809
  %811 = vmatpush1.msra.mxu0 %v810
  %812 = vmatprep.subr.mxu0 0.0
  %813 = vmatpush1.msra.mxu0 0.0
  %814 = vmatprep.subr.mxu0 0.0
  %815 = vmatpush1.msra.mxu0 0.0
  %816 = vmatprep.subr.mxu0 0.0
  %817 = vmatpush1.msra.mxu0 0.0
  %818 = vmatprep.subr.mxu0 0.0
  %819 = vmatpush1.msra.mxu0 0.0
  %820 = vmatprep.subr.mxu0 0.0
  %821 = vmatpush1.msra.mxu0 0.0
  %822 = vmatprep.subr.mxu0 0.0
  %823 = vmatpush1.msra.mxu0 0.0
  %824 = vmatprep.subr.mxu0 0.0
  %825 = vmatpush1.msra.mxu0 0.0
  %826 = vmatprep.subr.mxu0 0.0
  %827 = vmatpush1.msra.mxu0 0.0
  %828 = vmatprep.subr.mxu0 0.0
  %829 = vmatpush1.msra.mxu0 0.0
  %830 = vmatprep.subr.mxu0 0.0
  %831 = vmatpush1.msra.mxu0 0.0
  %832 = vmatprep.subr.mxu0 0.0
  %833 = vmatpush1.msra.mxu0 0.0
  %834 = vmatprep.subr.mxu0 0.0
  %835 = vmatpush1.msra.mxu0 0.0
  %836 = vmatprep.subr.mxu0 0.0
  %837 = vmatpush1.msra.mxu0 0.0
  %838 = vmatprep.subr.mxu0 0.0
  %839 = vmatpush1.msra.mxu0 0.0
  %840 = vmatprep.subr.mxu0 0.0
  %841 = vmatpush1.msra.mxu0 0.0
  %842 = vmatprep.subr.mxu0 0.0
  %843 = vmatpush1.msra.mxu0 0.0
  %844 = vmatprep.subr.mxu0 0.0
  %845 = vmatpush1.msra.mxu0 0.0
  %846 = vmatprep.subr.mxu0 0.0
  %847 = vmatpush1.msra.mxu0 0.0
  %848 = vmatprep.subr.mxu0 0.0
  %849 = vmatpush1.msra.mxu0 0.0
  %850 = vmatprep.subr.mxu0 0.0
  %851 = vmatpush1.msra.mxu0 0.0
  %852 = vmatprep.subr.mxu0 0.0
  %853 = vmatpush1.msra.mxu0 0.0
  %854 = vmatprep.subr.mxu0 0.0
  %855 = vmatpush1.msra.mxu0 0.0
  %856 = vmatprep.subr.mxu0 0.0
  %857 = vmatpush1.msra.mxu0 0.0
  %858 = vmatprep.subr.mxu0 0.0
  %859 = vmatpush1.msra.mxu0 0.0
  %860 = vmatprep.subr.mxu0 0.0
  %861 = vmatpush1.msra.mxu0 0.0
  %862 = vmatprep.subr.mxu0 0.0
  %863 = vmatpush1.msra.mxu0 0.0
  %864 = vmatprep.subr.mxu0 0.0
  %865 = vmatpush1.msra.mxu0 0.0
  %866 = vmatprep.subr.mxu0 0.0
  %867 = vmatpush1.msra.mxu0 0.0
  %868 = vmatprep.subr.mxu0 0.0
  %869 = vmatpush1.msra.mxu0 0.0
  %870 = vmatprep.subr.mxu0 0.0
  %871 = vmatpush1.msra.mxu0 0.0
  %872 = vmatprep.mubr.f32.mxu0 0.0
  %v873 = vand.u32 %v644, 4294901760
  %v874 = vsub.f32 %v644, %v873
  %875 = vmatmul.mubr.f32.gmra.mrb[0].mxu0 %v874
  %v876 = vpop.f32.mrb[0].mxu0
  %v877 = vadd.f32 %v801, %v876
  %v878 = vpop.f32.mrb[0].mxu0
  %879 = vdwg.mxu0
  %880 = vmatprep.subr.mxu0 0.0
  %v881 = vand.u32 %v17, 4294901760
  %882 = vmatpush1.msra.mxu0 %v881
  %883 = vmatprep.subr.mxu0 0.0
  %v884 = vand.u32 %v18, 4294901760
  %885 = vmatpush1.msra.mxu0 %v884
  %886 = vmatprep.subr.mxu0 0.0
  %887 = vmatpush1.msra.mxu0 0.0
  %888 = vmatprep.subr.mxu0 0.0
  %889 = vmatpush1.msra.mxu0 0.0
  %890 = vmatprep.subr.mxu0 0.0
  %891 = vmatpush1.msra.mxu0 0.0
  %892 = vmatprep.subr.mxu0 0.0
  %893 = vmatpush1.msra.mxu0 0.0
  %894 = vmatprep.subr.mxu0 0.0
  %895 = vmatpush1.msra.mxu0 0.0
  %896 = vmatprep.subr.mxu0 0.0
  %897 = vmatpush1.msra.mxu0 0.0
  %898 = vmatprep.subr.mxu0 0.0
  %899 = vmatpush1.msra.mxu0 0.0
  %900 = vmatprep.subr.mxu0 0.0
  %901 = vmatpush1.msra.mxu0 0.0
  %902 = vmatprep.subr.mxu0 0.0
  %903 = vmatpush1.msra.mxu0 0.0
  %904 = vmatprep.subr.mxu0 0.0
  %905 = vmatpush1.msra.mxu0 0.0
  %906 = vmatprep.subr.mxu0 0.0
  %907 = vmatpush1.msra.mxu0 0.0
  %908 = vmatprep.subr.mxu0 0.0
  %909 = vmatpush1.msra.mxu0 0.0
  %910 = vmatprep.subr.mxu0 0.0
  %911 = vmatpush1.msra.mxu0 0.0
  %912 = vmatprep.subr.mxu0 0.0
  %913 = vmatpush1.msra.mxu0 0.0
  %914 = vmatprep.subr.mxu0 0.0
  %915 = vmatpush1.msra.mxu0 0.0
  %916 = vmatprep.subr.mxu0 0.0
  %917 = vmatpush1.msra.mxu0 0.0
  %918 = vmatprep.subr.mxu0 0.0
  %919 = vmatpush1.msra.mxu0 0.0
  %920 = vmatprep.subr.mxu0 0.0
  %921 = vmatpush1.msra.mxu0 0.0
  %922 = vmatprep.subr.mxu0 0.0
  %923 = vmatpush1.msra.mxu0 0.0
  %924 = vmatprep.subr.mxu0 0.0
  %925 = vmatpush1.msra.mxu0 0.0
  %926 = vmatprep.subr.mxu0 0.0
  %927 = vmatpush1.msra.mxu0 0.0
  %928 = vmatprep.subr.mxu0 0.0
  %929 = vmatpush1.msra.mxu0 0.0
  %930 = vmatprep.subr.mxu0 0.0
  %931 = vmatpush1.msra.mxu0 0.0
  %932 = vmatprep.subr.mxu0 0.0
  %933 = vmatpush1.msra.mxu0 0.0
  %934 = vmatprep.subr.mxu0 0.0
  %935 = vmatpush1.msra.mxu0 0.0
  %936 = vmatprep.subr.mxu0 0.0
  %937 = vmatpush1.msra.mxu0 0.0
  %938 = vmatprep.subr.mxu0 0.0
  %939 = vmatpush1.msra.mxu0 0.0
  %940 = vmatprep.subr.mxu0 0.0
  %941 = vmatpush1.msra.mxu0 0.0
  %942 = vmatprep.subr.mxu0 0.0
  %943 = vmatpush1.msra.mxu0 0.0
  %944 = vmatprep.subr.mxu0 0.0
  %945 = vmatpush1.msra.mxu0 0.0
  %946 = vmatprep.mubr.f32.mxu0 0.0
  %v947 = vand.u32 %v644, 4294901760
  %v948 = vsub.f32 %v644, %v947
  %v949 = vand.u32 %v948, 4294901760
  %950 = vmatmul.mubr.f32.gmra.mrb[0].mxu0 %v949
  %v951 = vpop.f32.mrb[0].mxu0
  %v952 = vadd.f32 %v877, %v951
  %v953 = vpop.f32.mrb[0].mxu0
  %954 = vdwg.mxu0
  %955 = vmatprep.subr.mxu0 0.0
  %v956 = vand.u32 %v17, 4294901760
  %v957 = vsub.f32 %v17, %v956
  %v958 = vand.u32 %v957, 4294901760
  %959 = vmatpush1.msra.mxu0 %v958
  %960 = vmatprep.subr.mxu0 0.0
  %v961 = vand.u32 %v18, 4294901760
  %v962 = vsub.f32 %v18, %v961
  %v963 = vand.u32 %v962, 4294901760
  %964 = vmatpush1.msra.mxu0 %v963
  %965 = vmatprep.subr.mxu0 0.0
  %966 = vmatpush1.msra.mxu0 0.0
  %967 = vmatprep.subr.mxu0 0.0
  %968 = vmatpush1.msra.mxu0 0.0
  %969 = vmatprep.subr.mxu0 0.0
  %970 = vmatpush1.msra.mxu0 0.0
  %971 = vmatprep.subr.mxu0 0.0
  %972 = vmatpush1.msra.mxu0 0.0
  %973 = vmatprep.subr.mxu0 0.0
  %974 = vmatpush1.msra.mxu0 0.0
  %975 = vmatprep.subr.mxu0 0.0
  %976 = vmatpush1.msra.mxu0 0.0
  %977 = vmatprep.subr.mxu0 0.0
  %978 = vmatpush1.msra.mxu0 0.0
  %979 = vmatprep.subr.mxu0 0.0
  %980 = vmatpush1.msra.mxu0 0.0
  %981 = vmatprep.subr.mxu0 0.0
  %982 = vmatpush1.msra.mxu0 0.0
  %983 = vmatprep.subr.mxu0 0.0
  %984 = vmatpush1.msra.mxu0 0.0
  %985 = vmatprep.subr.mxu0 0.0
  %986 = vmatpush1.msra.mxu0 0.0
  %987 = vmatprep.subr.mxu0 0.0
  %988 = vmatpush1.msra.mxu0 0.0
  %989 = vmatprep.subr.mxu0 0.0
  %990 = vmatpush1.msra.mxu0 0.0
  %991 = vmatprep.subr.mxu0 0.0
  %992 = vmatpush1.msra.mxu0 0.0
  %993 = vmatprep.subr.mxu0 0.0
  %994 = vmatpush1.msra.mxu0 0.0
  %995 = vmatprep.subr.mxu0 0.0
  %996 = vmatpush1.msra.mxu0 0.0
  %997 = vmatprep.subr.mxu0 0.0
  %998 = vmatpush1.msra.mxu0 0.0
  %999 = vmatprep.subr.mxu0 0.0
  %1000 = vmatpush1.msra.mxu0 0.0
  %1001 = vmatprep.subr.mxu0 0.0
  %1002 = vmatpush1.msra.mxu0 0.0
  %1003 = vmatprep.subr.mxu0 0.0
  %1004 = vmatpush1.msra.mxu0 0.0
  %1005 = vmatprep.subr.mxu0 0.0
  %1006 = vmatpush1.msra.mxu0 0.0
  %1007 = vmatprep.subr.mxu0 0.0
  %1008 = vmatpush1.msra.mxu0 0.0
  %1009 = vmatprep.subr.mxu0 0.0
  %1010 = vmatpush1.msra.mxu0 0.0
  %1011 = vmatprep.subr.mxu0 0.0
  %1012 = vmatpush1.msra.mxu0 0.0
  %1013 = vmatprep.subr.mxu0 0.0
  %1014 = vmatpush1.msra.mxu0 0.0
  %1015 = vmatprep.subr.mxu0 0.0
  %1016 = vmatpush1.msra.mxu0 0.0
  %1017 = vmatprep.subr.mxu0 0.0
  %1018 = vmatpush1.msra.mxu0 0.0
  %1019 = vmatprep.subr.mxu0 0.0
  %1020 = vmatpush1.msra.mxu0 0.0
  %1021 = vmatprep.subr.mxu0 0.0
  %1022 = vmatpush1.msra.mxu0 0.0
  %1023 = vmatprep.subr.mxu0 0.0
  %1024 = vmatpush1.msra.mxu0 0.0
  %1025 = vmatprep.mubr.f32.mxu0 0.0
  %v1026 = vand.u32 %v644, 4294901760
  %1027 = vmatmul.mubr.f32.gmra.mrb[0].mxu0 %v1026
  %v1028 = vpop.f32.mrb[0].mxu0
  %v1029 = vadd.f32 %v952, %v1028
  %v1030 = vpop.f32.mrb[0].mxu0
  %1031 = vdwg.mxu0
  %1032 = vmatprep.subr.mxu0 0.0
  %v1033 = vand.u32 %v17, 4294901760
  %1034 = vmatpush1.msra.mxu0 %v1033
  %1035 = vmatprep.subr.mxu0 0.0
  %v1036 = vand.u32 %v18, 4294901760
  %1037 = vmatpush1.msra.mxu0 %v1036
  %1038 = vmatprep.subr.mxu0 0.0
  %1039 = vmatpush1.msra.mxu0 0.0
  %1040 = vmatprep.subr.mxu0 0.0
  %1041 = vmatpush1.msra.mxu0 0.0
  %1042 = vmatprep.subr.mxu0 0.0
  %1043 = vmatpush1.msra.mxu0 0.0
  %1044 = vmatprep.subr.mxu0 0.0
  %1045 = vmatpush1.msra.mxu0 0.0
  %1046 = vmatprep.subr.mxu0 0.0
  %1047 = vmatpush1.msra.mxu0 0.0
  %1048 = vmatprep.subr.mxu0 0.0
  %1049 = vmatpush1.msra.mxu0 0.0
  %1050 = vmatprep.subr.mxu0 0.0
  %1051 = vmatpush1.msra.mxu0 0.0
  %1052 = vmatprep.subr.mxu0 0.0
  %1053 = vmatpush1.msra.mxu0 0.0
  %1054 = vmatprep.subr.mxu0 0.0
  %1055 = vmatpush1.msra.mxu0 0.0
  %1056 = vmatprep.subr.mxu0 0.0
  %1057 = vmatpush1.msra.mxu0 0.0
  %1058 = vmatprep.subr.mxu0 0.0
  %1059 = vmatpush1.msra.mxu0 0.0
  %1060 = vmatprep.subr.mxu0 0.0
  %1061 = vmatpush1.msra.mxu0 0.0
  %1062 = vmatprep.subr.mxu0 0.0
  %1063 = vmatpush1.msra.mxu0 0.0
  %1064 = vmatprep.subr.mxu0 0.0
  %1065 = vmatpush1.msra.mxu0 0.0
  %1066 = vmatprep.subr.mxu0 0.0
  %1067 = vmatpush1.msra.mxu0 0.0
  %1068 = vmatprep.subr.mxu0 0.0
  %1069 = vmatpush1.msra.mxu0 0.0
  %1070 = vmatprep.subr.mxu0 0.0
  %1071 = vmatpush1.msra.mxu0 0.0
  %1072 = vmatprep.subr.mxu0 0.0
  %1073 = vmatpush1.msra.mxu0 0.0
  %1074 = vmatprep.subr.mxu0 0.0
  %1075 = vmatpush1.msra.mxu0 0.0
  %1076 = vmatprep.subr.mxu0 0.0
  %1077 = vmatpush1.msra.mxu0 0.0
  %1078 = vmatprep.subr.mxu0 0.0
  %1079 = vmatpush1.msra.mxu0 0.0
  %1080 = vmatprep.subr.mxu0 0.0
  %1081 = vmatpush1.msra.mxu0 0.0
  %1082 = vmatprep.subr.mxu0 0.0
  %1083 = vmatpush1.msra.mxu0 0.0
  %1084 = vmatprep.subr.mxu0 0.0
  %1085 = vmatpush1.msra.mxu0 0.0
  %1086 = vmatprep.subr.mxu0 0.0
  %1087 = vmatpush1.msra.mxu0 0.0
  %1088 = vmatprep.subr.mxu0 0.0
  %1089 = vmatpush1.msra.mxu0 0.0
  %1090 = vmatprep.subr.mxu0 0.0
  %1091 = vmatpush1.msra.mxu0 0.0
  %1092 = vmatprep.subr.mxu0 0.0
  %1093 = vmatpush1.msra.mxu0 0.0
  %1094 = vmatprep.subr.mxu0 0.0
  %1095 = vmatpush1.msra.mxu0 0.0
  %1096 = vmatprep.subr.mxu0 0.0
  %1097 = vmatpush1.msra.mxu0 0.0
  %1098 = vmatprep.mubr.f32.mxu0 0.0
  %v1099 = vand.u32 %v644, 4294901760
  %1100 = vmatmul.mubr.f32.gmra.mrb[0].mxu0 %v1099
  %v1101 = vpop.f32.mrb[0].mxu0
  %v1102 = vadd.f32 %v1029, %v1101
  %v1103 = vpop.f32.mrb[0].mxu0
  %1104 = vdwg.mxu0
  %v1105 = vlaneseq
  %v1106 = vshrl.u32 %v1105, 7
  %v1107 = vsub.s32 0, %v1106
  %v1108 = vrot.slane %v23, %v1107
  %v1109 = vadd.f32 %v1102, %v1108
  %v1110 = vmul.f32 %v1109, %v25
  %vm1111 = vcmask 64512
  %v1112 = vsel %vm1111, %v1110, 0.0
  %1113 = vadd.xlane.f32.xlu0 %v1112
  %v1114 = vpop.xlane.xlu0 %1113
  %v1115 = vadd.f32 %v1114, 1.0
  %v1116 = vmul.f32 %v1109, %v26
  %v1117 = vsel %vm1111, %v1116, 0.0
  %1118 = vadd.xlane.f32.xlu0 %v1117
  %v1119 = vpop.xlane.xlu0 %1118
  %v1120 = vlaneseq
  %v1121 = vshrl.u32 %v1120, 7
  %v1122 = vsub.s32 0, %v1121
  %v1123 = vrot.slane %v24, %v1122
  %v1124 = vmul.f32 %v1123, %v25
  %v1125 = vsel %vm1111, %v1124, 0.0
  %1126 = vadd.xlane.f32.xlu0 %v1125
  %v1127 = vpop.xlane.xlu0 %1126
  %v1128 = vld [vmem:[%s2] sm:$0xff]
  %v1129 = vld [vmem:[%s2 + $0x8] sm:$0xff]
  %v1131 = vsel %vm1111, %v27, 0
  %v1133 = vand.u32 %v1129, 4294901760
  %1134 = vmatprep.subr.mxu0 %v1133
  %v1135 = vand.u32 %v1128, 4294901760
  %1136 = vmatpush1.msra.mxu0 %v1135
  %1137 = vmatprep.subr.mxu0 0.0
  %1138 = vmatpush1.msra.mxu0 0.0
  %1139 = vmatprep.subr.mxu0 0.0
  %1140 = vmatpush1.msra.mxu0 0.0
  %1141 = vmatprep.subr.mxu0 0.0
  %1142 = vmatpush1.msra.mxu0 0.0
  %1143 = vmatprep.subr.mxu0 0.0
  %1144 = vmatpush1.msra.mxu0 0.0
  %1145 = vmatprep.subr.mxu0 0.0
  %1146 = vmatpush1.msra.mxu0 0.0
  %1147 = vmatprep.subr.mxu0 0.0
  %1148 = vmatpush1.msra.mxu0 0.0
  %1149 = vmatprep.subr.mxu0 0.0
  %1150 = vmatpush1.msra.mxu0 0.0
  %1151 = vmatprep.subr.mxu0 0.0
  %1152 = vmatpush1.msra.mxu0 0.0
  %1153 = vmatprep.subr.mxu0 0.0
  %1154 = vmatpush1.msra.mxu0 0.0
  %1155 = vmatprep.subr.mxu0 0.0
  %1156 = vmatpush1.msra.mxu0 0.0
  %1157 = vmatprep.subr.mxu0 0.0
  %1158 = vmatpush1.msra.mxu0 0.0
  %1159 = vmatprep.subr.mxu0 0.0
  %1160 = vmatpush1.msra.mxu0 0.0
  %1161 = vmatprep.subr.mxu0 0.0
  %1162 = vmatpush1.msra.mxu0 0.0
  %1163 = vmatprep.subr.mxu0 0.0
  %1164 = vmatpush1.msra.mxu0 0.0
  %1165 = vmatprep.subr.mxu0 0.0
  %1166 = vmatpush1.msra.mxu0 0.0
  %1167 = vmatprep.subr.mxu0 0.0
  %1168 = vmatpush1.msra.mxu0 0.0
  %1169 = vmatprep.subr.mxu0 0.0
  %1170 = vmatpush1.msra.mxu0 0.0
  %1171 = vmatprep.subr.mxu0 0.0
  %1172 = vmatpush1.msra.mxu0 0.0
  %1173 = vmatprep.subr.mxu0 0.0
  %1174 = vmatpush1.msra.mxu0 0.0
  %1175 = vmatprep.subr.mxu0 0.0
  %1176 = vmatpush1.msra.mxu0 0.0
  %1177 = vmatprep.subr.mxu0 0.0
  %1178 = vmatpush1.msra.mxu0 0.0
  %1179 = vmatprep.subr.mxu0 0.0
  %1180 = vmatpush1.msra.mxu0 0.0
  %1181 = vmatprep.subr.mxu0 0.0
  %1182 = vmatpush1.msra.mxu0 0.0
  %1183 = vmatprep.subr.mxu0 0.0
  %1184 = vmatpush1.msra.mxu0 0.0
  %1185 = vmatprep.subr.mxu0 0.0
  %1186 = vmatpush1.msra.mxu0 0.0
  %1187 = vmatprep.subr.mxu0 0.0
  %1188 = vmatpush1.msra.mxu0 0.0
  %1189 = vmatprep.subr.mxu0 0.0
  %1190 = vmatpush1.msra.mxu0 0.0
  %1191 = vmatprep.subr.mxu0 0.0
  %1192 = vmatpush1.msra.mxu0 0.0
  %1193 = vmatprep.subr.mxu0 0.0
  %1194 = vmatpush1.msra.mxu0 0.0
  %1195 = vmatprep.subr.mxu0 0.0
  %1196 = vmatpush1.msra.mxu0 0.0
  %1197 = vmatprep.subr.mxu0 0.0
  %1198 = vmatpush1.msra.mxu0 0.0
  %1199 = vmatprep.mubr.f32.mxu0 0.0
  %v1200 = vand.u32 %v1131, 4294901760
  %v1201 = vsub.f32 %v1131, %v1200
  %v1202 = vand.u32 %v1201, 4294901760
  %v1203 = vsub.f32 %v1201, %v1202
  %v1204 = vand.u32 %v1203, 4294901760
  %1205 = vmatmul.mubr.f32.gmra.mrb[0].mxu0 %v1204
  %v1206 = vpop.f32.mrb[0].mxu0
  %v1207 = vadd.f32 %v1127, %v1206
  %v1208 = vpop.f32.mrb[0].mxu0
  %v1209 = vadd.f32 %v1127, %v1208
  %1210 = vdwg.mxu0
  %v1211 = vand.u32 %v1129, 4294901760
  %v1212 = vsub.f32 %v1129, %v1211
  %v1213 = vand.u32 %v1212, 4294901760
  %v1214 = vsub.f32 %v1212, %v1213
  %v1215 = vand.u32 %v1214, 4294901760
  %1216 = vmatprep.subr.mxu0 %v1215
  %v1217 = vand.u32 %v1128, 4294901760
  %v1218 = vsub.f32 %v1128, %v1217
  %v1219 = vand.u32 %v1218, 4294901760
  %v1220 = vsub.f32 %v1218, %v1219
  %v1221 = vand.u32 %v1220, 4294901760
  %1222 = vmatpush1.msra.mxu0 %v1221
  %1223 = vmatprep.subr.mxu0 0.0
  %1224 = vmatpush1.msra.mxu0 0.0
  %1225 = vmatprep.subr.mxu0 0.0
  %1226 = vmatpush1.msra.mxu0 0.0
  %1227 = vmatprep.subr.mxu0 0.0
  %1228 = vmatpush1.msra.mxu0 0.0
  %1229 = vmatprep.subr.mxu0 0.0
  %1230 = vmatpush1.msra.mxu0 0.0
  %1231 = vmatprep.subr.mxu0 0.0
  %1232 = vmatpush1.msra.mxu0 0.0
  %1233 = vmatprep.subr.mxu0 0.0
  %1234 = vmatpush1.msra.mxu0 0.0
  %1235 = vmatprep.subr.mxu0 0.0
  %1236 = vmatpush1.msra.mxu0 0.0
  %1237 = vmatprep.subr.mxu0 0.0
  %1238 = vmatpush1.msra.mxu0 0.0
  %1239 = vmatprep.subr.mxu0 0.0
  %1240 = vmatpush1.msra.mxu0 0.0
  %1241 = vmatprep.subr.mxu0 0.0
  %1242 = vmatpush1.msra.mxu0 0.0
  %1243 = vmatprep.subr.mxu0 0.0
  %1244 = vmatpush1.msra.mxu0 0.0
  %1245 = vmatprep.subr.mxu0 0.0
  %1246 = vmatpush1.msra.mxu0 0.0
  %1247 = vmatprep.subr.mxu0 0.0
  %1248 = vmatpush1.msra.mxu0 0.0
  %1249 = vmatprep.subr.mxu0 0.0
  %1250 = vmatpush1.msra.mxu0 0.0
  %1251 = vmatprep.subr.mxu0 0.0
  %1252 = vmatpush1.msra.mxu0 0.0
  %1253 = vmatprep.subr.mxu0 0.0
  %1254 = vmatpush1.msra.mxu0 0.0
  %1255 = vmatprep.subr.mxu0 0.0
  %1256 = vmatpush1.msra.mxu0 0.0
  %1257 = vmatprep.subr.mxu0 0.0
  %1258 = vmatpush1.msra.mxu0 0.0
  %1259 = vmatprep.subr.mxu0 0.0
  %1260 = vmatpush1.msra.mxu0 0.0
  %1261 = vmatprep.subr.mxu0 0.0
  %1262 = vmatpush1.msra.mxu0 0.0
  %1263 = vmatprep.subr.mxu0 0.0
  %1264 = vmatpush1.msra.mxu0 0.0
  %1265 = vmatprep.subr.mxu0 0.0
  %1266 = vmatpush1.msra.mxu0 0.0
  %1267 = vmatprep.subr.mxu0 0.0
  %1268 = vmatpush1.msra.mxu0 0.0
  %1269 = vmatprep.subr.mxu0 0.0
  %1270 = vmatpush1.msra.mxu0 0.0
  %1271 = vmatprep.subr.mxu0 0.0
  %1272 = vmatpush1.msra.mxu0 0.0
  %1273 = vmatprep.subr.mxu0 0.0
  %1274 = vmatpush1.msra.mxu0 0.0
  %1275 = vmatprep.subr.mxu0 0.0
  %1276 = vmatpush1.msra.mxu0 0.0
  %1277 = vmatprep.subr.mxu0 0.0
  %1278 = vmatpush1.msra.mxu0 0.0
  %1279 = vmatprep.subr.mxu0 0.0
  %1280 = vmatpush1.msra.mxu0 0.0
  %1281 = vmatprep.subr.mxu0 0.0
  %1282 = vmatpush1.msra.mxu0 0.0
  %1283 = vmatprep.subr.mxu0 0.0
  %1284 = vmatpush1.msra.mxu0 0.0
  %1285 = vmatprep.mubr.f32.mxu0 0.0
  %v1286 = vand.u32 %v1131, 4294901760
  %1287 = vmatmul.mubr.f32.gmra.mrb[0].mxu0 %v1286
  %v1288 = vpop.f32.mrb[0].mxu0
  %v1289 = vadd.f32 %v1207, %v1288
  %v1290 = vpop.f32.mrb[0].mxu0
  %v1291 = vadd.f32 %v1209, %v1290
  %1292 = vdwg.mxu0
  %v1293 = vand.u32 %v1129, 4294901760
  %v1294 = vsub.f32 %v1129, %v1293
  %1295 = vmatprep.subr.mxu0 %v1294
  %v1296 = vand.u32 %v1128, 4294901760
  %v1297 = vsub.f32 %v1128, %v1296
  %1298 = vmatpush1.msra.mxu0 %v1297
  %1299 = vmatprep.subr.mxu0 0.0
  %1300 = vmatpush1.msra.mxu0 0.0
  %1301 = vmatprep.subr.mxu0 0.0
  %1302 = vmatpush1.msra.mxu0 0.0
  %1303 = vmatprep.subr.mxu0 0.0
  %1304 = vmatpush1.msra.mxu0 0.0
  %1305 = vmatprep.subr.mxu0 0.0
  %1306 = vmatpush1.msra.mxu0 0.0
  %1307 = vmatprep.subr.mxu0 0.0
  %1308 = vmatpush1.msra.mxu0 0.0
  %1309 = vmatprep.subr.mxu0 0.0
  %1310 = vmatpush1.msra.mxu0 0.0
  %1311 = vmatprep.subr.mxu0 0.0
  %1312 = vmatpush1.msra.mxu0 0.0
  %1313 = vmatprep.subr.mxu0 0.0
  %1314 = vmatpush1.msra.mxu0 0.0
  %1315 = vmatprep.subr.mxu0 0.0
  %1316 = vmatpush1.msra.mxu0 0.0
  %1317 = vmatprep.subr.mxu0 0.0
  %1318 = vmatpush1.msra.mxu0 0.0
  %1319 = vmatprep.subr.mxu0 0.0
  %1320 = vmatpush1.msra.mxu0 0.0
  %1321 = vmatprep.subr.mxu0 0.0
  %1322 = vmatpush1.msra.mxu0 0.0
  %1323 = vmatprep.subr.mxu0 0.0
  %1324 = vmatpush1.msra.mxu0 0.0
  %1325 = vmatprep.subr.mxu0 0.0
  %1326 = vmatpush1.msra.mxu0 0.0
  %1327 = vmatprep.subr.mxu0 0.0
  %1328 = vmatpush1.msra.mxu0 0.0
  %1329 = vmatprep.subr.mxu0 0.0
  %1330 = vmatpush1.msra.mxu0 0.0
  %1331 = vmatprep.subr.mxu0 0.0
  %1332 = vmatpush1.msra.mxu0 0.0
  %1333 = vmatprep.subr.mxu0 0.0
  %1334 = vmatpush1.msra.mxu0 0.0
  %1335 = vmatprep.subr.mxu0 0.0
  %1336 = vmatpush1.msra.mxu0 0.0
  %1337 = vmatprep.subr.mxu0 0.0
  %1338 = vmatpush1.msra.mxu0 0.0
  %1339 = vmatprep.subr.mxu0 0.0
  %1340 = vmatpush1.msra.mxu0 0.0
  %1341 = vmatprep.subr.mxu0 0.0
  %1342 = vmatpush1.msra.mxu0 0.0
  %1343 = vmatprep.subr.mxu0 0.0
  %1344 = vmatpush1.msra.mxu0 0.0
  %1345 = vmatprep.subr.mxu0 0.0
  %1346 = vmatpush1.msra.mxu0 0.0
  %1347 = vmatprep.subr.mxu0 0.0
  %1348 = vmatpush1.msra.mxu0 0.0
  %1349 = vmatprep.subr.mxu0 0.0
  %1350 = vmatpush1.msra.mxu0 0.0
  %1351 = vmatprep.subr.mxu0 0.0
  %1352 = vmatpush1.msra.mxu0 0.0
  %1353 = vmatprep.subr.mxu0 0.0
  %1354 = vmatpush1.msra.mxu0 0.0
  %1355 = vmatprep.subr.mxu0 0.0
  %1356 = vmatpush1.msra.mxu0 0.0
  %1357 = vmatprep.subr.mxu0 0.0
  %1358 = vmatpush1.msra.mxu0 0.0
  %1359 = vmatprep.subr.mxu0 0.0
  %1360 = vmatpush1.msra.mxu0 0.0
  %1361 = vmatprep.mubr.f32.mxu0 0.0
  %v1362 = vand.u32 %v1131, 4294901760
  %v1363 = vsub.f32 %v1131, %v1362
  %1364 = vmatmul.mubr.f32.gmra.mrb[0].mxu0 %v1363
  %v1365 = vpop.f32.mrb[0].mxu0
  %v1366 = vadd.f32 %v1289, %v1365
  %v1367 = vpop.f32.mrb[0].mxu0
  %v1368 = vadd.f32 %v1291, %v1367
  %1369 = vdwg.mxu0
  %v1370 = vand.u32 %v1129, 4294901760
  %1371 = vmatprep.subr.mxu0 %v1370
  %v1372 = vand.u32 %v1128, 4294901760
  %1373 = vmatpush1.msra.mxu0 %v1372
  %1374 = vmatprep.subr.mxu0 0.0
  %1375 = vmatpush1.msra.mxu0 0.0
  %1376 = vmatprep.subr.mxu0 0.0
  %1377 = vmatpush1.msra.mxu0 0.0
  %1378 = vmatprep.subr.mxu0 0.0
  %1379 = vmatpush1.msra.mxu0 0.0
  %1380 = vmatprep.subr.mxu0 0.0
  %1381 = vmatpush1.msra.mxu0 0.0
  %1382 = vmatprep.subr.mxu0 0.0
  %1383 = vmatpush1.msra.mxu0 0.0
  %1384 = vmatprep.subr.mxu0 0.0
  %1385 = vmatpush1.msra.mxu0 0.0
  %1386 = vmatprep.subr.mxu0 0.0
  %1387 = vmatpush1.msra.mxu0 0.0
  %1388 = vmatprep.subr.mxu0 0.0
  %1389 = vmatpush1.msra.mxu0 0.0
  %1390 = vmatprep.subr.mxu0 0.0
  %1391 = vmatpush1.msra.mxu0 0.0
  %1392 = vmatprep.subr.mxu0 0.0
  %1393 = vmatpush1.msra.mxu0 0.0
  %1394 = vmatprep.subr.mxu0 0.0
  %1395 = vmatpush1.msra.mxu0 0.0
  %1396 = vmatprep.subr.mxu0 0.0
  %1397 = vmatpush1.msra.mxu0 0.0
  %1398 = vmatprep.subr.mxu0 0.0
  %1399 = vmatpush1.msra.mxu0 0.0
  %1400 = vmatprep.subr.mxu0 0.0
  %1401 = vmatpush1.msra.mxu0 0.0
  %1402 = vmatprep.subr.mxu0 0.0
  %1403 = vmatpush1.msra.mxu0 0.0
  %1404 = vmatprep.subr.mxu0 0.0
  %1405 = vmatpush1.msra.mxu0 0.0
  %1406 = vmatprep.subr.mxu0 0.0
  %1407 = vmatpush1.msra.mxu0 0.0
  %1408 = vmatprep.subr.mxu0 0.0
  %1409 = vmatpush1.msra.mxu0 0.0
  %1410 = vmatprep.subr.mxu0 0.0
  %1411 = vmatpush1.msra.mxu0 0.0
  %1412 = vmatprep.subr.mxu0 0.0
  %1413 = vmatpush1.msra.mxu0 0.0
  %1414 = vmatprep.subr.mxu0 0.0
  %1415 = vmatpush1.msra.mxu0 0.0
  %1416 = vmatprep.subr.mxu0 0.0
  %1417 = vmatpush1.msra.mxu0 0.0
  %1418 = vmatprep.subr.mxu0 0.0
  %1419 = vmatpush1.msra.mxu0 0.0
  %1420 = vmatprep.subr.mxu0 0.0
  %1421 = vmatpush1.msra.mxu0 0.0
  %1422 = vmatprep.subr.mxu0 0.0
  %1423 = vmatpush1.msra.mxu0 0.0
  %1424 = vmatprep.subr.mxu0 0.0
  %1425 = vmatpush1.msra.mxu0 0.0
  %1426 = vmatprep.subr.mxu0 0.0
  %1427 = vmatpush1.msra.mxu0 0.0
  %1428 = vmatprep.subr.mxu0 0.0
  %1429 = vmatpush1.msra.mxu0 0.0
  %1430 = vmatprep.subr.mxu0 0.0
  %1431 = vmatpush1.msra.mxu0 0.0
  %1432 = vmatprep.subr.mxu0 0.0
  %1433 = vmatpush1.msra.mxu0 0.0
  %1434 = vmatprep.subr.mxu0 0.0
  %1435 = vmatpush1.msra.mxu0 0.0
  %1436 = vmatprep.mubr.f32.mxu0 0.0
  %v1437 = vand.u32 %v1131, 4294901760
  %v1438 = vsub.f32 %v1131, %v1437
  %v1439 = vand.u32 %v1438, 4294901760
  %1440 = vmatmul.mubr.f32.gmra.mrb[0].mxu0 %v1439
  %v1441 = vpop.f32.mrb[0].mxu0
  %v1442 = vadd.f32 %v1366, %v1441
  %v1443 = vpop.f32.mrb[0].mxu0
  %v1444 = vadd.f32 %v1368, %v1443
  %1445 = vdwg.mxu0
  %v1446 = vand.u32 %v1129, 4294901760
  %v1447 = vsub.f32 %v1129, %v1446
  %v1448 = vand.u32 %v1447, 4294901760
  %1449 = vmatprep.subr.mxu0 %v1448
  %v1450 = vand.u32 %v1128, 4294901760
  %v1451 = vsub.f32 %v1128, %v1450
  %v1452 = vand.u32 %v1451, 4294901760
  %1453 = vmatpush1.msra.mxu0 %v1452
  %1454 = vmatprep.subr.mxu0 0.0
  %1455 = vmatpush1.msra.mxu0 0.0
  %1456 = vmatprep.subr.mxu0 0.0
  %1457 = vmatpush1.msra.mxu0 0.0
  %1458 = vmatprep.subr.mxu0 0.0
  %1459 = vmatpush1.msra.mxu0 0.0
  %1460 = vmatprep.subr.mxu0 0.0
  %1461 = vmatpush1.msra.mxu0 0.0
  %1462 = vmatprep.subr.mxu0 0.0
  %1463 = vmatpush1.msra.mxu0 0.0
  %1464 = vmatprep.subr.mxu0 0.0
  %1465 = vmatpush1.msra.mxu0 0.0
  %1466 = vmatprep.subr.mxu0 0.0
  %1467 = vmatpush1.msra.mxu0 0.0
  %1468 = vmatprep.subr.mxu0 0.0
  %1469 = vmatpush1.msra.mxu0 0.0
  %1470 = vmatprep.subr.mxu0 0.0
  %1471 = vmatpush1.msra.mxu0 0.0
  %1472 = vmatprep.subr.mxu0 0.0
  %1473 = vmatpush1.msra.mxu0 0.0
  %1474 = vmatprep.subr.mxu0 0.0
  %1475 = vmatpush1.msra.mxu0 0.0
  %1476 = vmatprep.subr.mxu0 0.0
  %1477 = vmatpush1.msra.mxu0 0.0
  %1478 = vmatprep.subr.mxu0 0.0
  %1479 = vmatpush1.msra.mxu0 0.0
  %1480 = vmatprep.subr.mxu0 0.0
  %1481 = vmatpush1.msra.mxu0 0.0
  %1482 = vmatprep.subr.mxu0 0.0
  %1483 = vmatpush1.msra.mxu0 0.0
  %1484 = vmatprep.subr.mxu0 0.0
  %1485 = vmatpush1.msra.mxu0 0.0
  %1486 = vmatprep.subr.mxu0 0.0
  %1487 = vmatpush1.msra.mxu0 0.0
  %1488 = vmatprep.subr.mxu0 0.0
  %1489 = vmatpush1.msra.mxu0 0.0
  %1490 = vmatprep.subr.mxu0 0.0
  %1491 = vmatpush1.msra.mxu0 0.0
  %1492 = vmatprep.subr.mxu0 0.0
  %1493 = vmatpush1.msra.mxu0 0.0
  %1494 = vmatprep.subr.mxu0 0.0
  %1495 = vmatpush1.msra.mxu0 0.0
  %1496 = vmatprep.subr.mxu0 0.0
  %1497 = vmatpush1.msra.mxu0 0.0
  %1498 = vmatprep.subr.mxu0 0.0
  %1499 = vmatpush1.msra.mxu0 0.0
  %1500 = vmatprep.subr.mxu0 0.0
  %1501 = vmatpush1.msra.mxu0 0.0
  %1502 = vmatprep.subr.mxu0 0.0
  %1503 = vmatpush1.msra.mxu0 0.0
  %1504 = vmatprep.subr.mxu0 0.0
  %1505 = vmatpush1.msra.mxu0 0.0
  %1506 = vmatprep.subr.mxu0 0.0
  %1507 = vmatpush1.msra.mxu0 0.0
  %1508 = vmatprep.subr.mxu0 0.0
  %1509 = vmatpush1.msra.mxu0 0.0
  %1510 = vmatprep.subr.mxu0 0.0
  %1511 = vmatpush1.msra.mxu0 0.0
  %1512 = vmatprep.subr.mxu0 0.0
  %1513 = vmatpush1.msra.mxu0 0.0
  %1514 = vmatprep.subr.mxu0 0.0
  %1515 = vmatpush1.msra.mxu0 0.0
  %1516 = vmatprep.mubr.f32.mxu0 0.0
  %v1517 = vand.u32 %v1131, 4294901760
  %1518 = vmatmul.mubr.f32.gmra.mrb[0].mxu0 %v1517
  %v1519 = vpop.f32.mrb[0].mxu0
  %v1520 = vadd.f32 %v1442, %v1519
  %v1521 = vpop.f32.mrb[0].mxu0
  %v1522 = vadd.f32 %v1444, %v1521
  %1523 = vdwg.mxu0
  %v1524 = vand.u32 %v1129, 4294901760
  %1525 = vmatprep.subr.mxu0 %v1524
  %v1526 = vand.u32 %v1128, 4294901760
  %1527 = vmatpush1.msra.mxu0 %v1526
  %1528 = vmatprep.subr.mxu0 0.0
  %1529 = vmatpush1.msra.mxu0 0.0
  %1530 = vmatprep.subr.mxu0 0.0
  %1531 = vmatpush1.msra.mxu0 0.0
  %1532 = vmatprep.subr.mxu0 0.0
  %1533 = vmatpush1.msra.mxu0 0.0
  %1534 = vmatprep.subr.mxu0 0.0
  %1535 = vmatpush1.msra.mxu0 0.0
  %1536 = vmatprep.subr.mxu0 0.0
  %1537 = vmatpush1.msra.mxu0 0.0
  %1538 = vmatprep.subr.mxu0 0.0
  %1539 = vmatpush1.msra.mxu0 0.0
  %1540 = vmatprep.subr.mxu0 0.0
  %1541 = vmatpush1.msra.mxu0 0.0
  %1542 = vmatprep.subr.mxu0 0.0
  %1543 = vmatpush1.msra.mxu0 0.0
  %1544 = vmatprep.subr.mxu0 0.0
  %1545 = vmatpush1.msra.mxu0 0.0
  %1546 = vmatprep.subr.mxu0 0.0
  %1547 = vmatpush1.msra.mxu0 0.0
  %1548 = vmatprep.subr.mxu0 0.0
  %1549 = vmatpush1.msra.mxu0 0.0
  %1550 = vmatprep.subr.mxu0 0.0
  %1551 = vmatpush1.msra.mxu0 0.0
  %1552 = vmatprep.subr.mxu0 0.0
  %1553 = vmatpush1.msra.mxu0 0.0
  %1554 = vmatprep.subr.mxu0 0.0
  %1555 = vmatpush1.msra.mxu0 0.0
  %1556 = vmatprep.subr.mxu0 0.0
  %1557 = vmatpush1.msra.mxu0 0.0
  %1558 = vmatprep.subr.mxu0 0.0
  %1559 = vmatpush1.msra.mxu0 0.0
  %1560 = vmatprep.subr.mxu0 0.0
  %1561 = vmatpush1.msra.mxu0 0.0
  %1562 = vmatprep.subr.mxu0 0.0
  %1563 = vmatpush1.msra.mxu0 0.0
  %1564 = vmatprep.subr.mxu0 0.0
  %1565 = vmatpush1.msra.mxu0 0.0
  %1566 = vmatprep.subr.mxu0 0.0
  %1567 = vmatpush1.msra.mxu0 0.0
  %1568 = vmatprep.subr.mxu0 0.0
  %1569 = vmatpush1.msra.mxu0 0.0
  %1570 = vmatprep.subr.mxu0 0.0
  %1571 = vmatpush1.msra.mxu0 0.0
  %1572 = vmatprep.subr.mxu0 0.0
  %1573 = vmatpush1.msra.mxu0 0.0
  %1574 = vmatprep.subr.mxu0 0.0
  %1575 = vmatpush1.msra.mxu0 0.0
  %1576 = vmatprep.subr.mxu0 0.0
  %1577 = vmatpush1.msra.mxu0 0.0
  %1578 = vmatprep.subr.mxu0 0.0
  %1579 = vmatpush1.msra.mxu0 0.0
  %1580 = vmatprep.subr.mxu0 0.0
  %1581 = vmatpush1.msra.mxu0 0.0
  %1582 = vmatprep.subr.mxu0 0.0
  %1583 = vmatpush1.msra.mxu0 0.0
  %1584 = vmatprep.subr.mxu0 0.0
  %1585 = vmatpush1.msra.mxu0 0.0
  %1586 = vmatprep.subr.mxu0 0.0
  %1587 = vmatpush1.msra.mxu0 0.0
  %1588 = vmatprep.subr.mxu0 0.0
  %1589 = vmatpush1.msra.mxu0 0.0
  %1590 = vmatprep.mubr.f32.mxu0 0.0
  %v1591 = vand.u32 %v1131, 4294901760
  %1592 = vmatmul.mubr.f32.gmra.mrb[0].mxu0 %v1591
  %v1593 = vpop.f32.mrb[0].mxu0
  %v1594 = vadd.f32 %v1520, %v1593
  %v1595 = vpop.f32.mrb[0].mxu0
  %v1596 = vadd.f32 %v1522, %v1595
  %1597 = vdwg.mxu0
  %v1598 = vmul.f32 %v1594, %v1115
  %v1599 = vmul.f32 %v1596, %v1115
  %v1600 = vadd.f32 %v1598, %v1119
  %v1601 = vadd.f32 %v1599, %v1119
  %1602 = vst [vmem:[%s4] sm:$0xff] %v1600
  %1603 = vst [vmem:[%s4 + $0x8] sm:$0xff] %v1601
  // Predicated region
  $region18: #{_fused_forward.1} parent=0 // pred_check
    _
  $region19: #{_fused_forward.1} parent=0 // pred_check_branch
    %1605 = sbr.rel (0) target = $region21
  $region20: #{_fused_forward.1} parent=0 // pred_region
    _
  $region21: #{_fused_forward.1} parent=0 // pred_fallthru
    _
  // Predicated region
  $region22: #{_fused_forward.1} parent=0 // pred_check
    _
  $region23: #{_fused_forward.1} parent=0 // pred_check_branch
    %1607 = sbr.rel (0) target = $region25
  $region24: #{_fused_forward.1} parent=0 // pred_region
    _
  $region25: #{_fused_forward.1} parent=0 // pred_fallthru
    _

</llo_original>
